<compile_context>
chip_gen: v7x
topology: tpu7x:2x2x1
jax: 0.10.0
libtpu: 0.0.40
codegen_flags: <defaults>
</compile_context>

<pallas_src>
import functools
from collections import OrderedDict

import jax
import jax.numpy as jnp
from jax.experimental import pallas as pl
from jax.experimental.pallas import tpu as pltpu


# ----------------------------- helpers -------------------------------------

def _round_up(a, m):
    return ((a + m - 1) // m) * m


@functools.lru_cache(maxsize=None)
def _vmem_limit_bytes():
    """~3/4 of physical VMEM: 96 MiB on v5e/v6e (128 MiB phys), 48 MiB on v7x."""
    cap = None
    try:
        cap = getattr(pltpu.get_tpu_info(), "vmem_capacity_bytes", None)
    except Exception:
        cap = None
    if not cap:
        cap = 64 * 1024 * 1024          # conservative default (v7x physical)
    return int(min(cap * 3 // 4, 112 * 1024 * 1024))


# ----------------------------- Pallas kernels ------------------------------

def _conv_fused_kernel(x_ref, w_ref, b_ref, o_ref, *, wp, relu):
    """Direct convolution on a spatially-flattened image (no im2col).

    x_ref: (1, Lx, Cin)       zero-padded image, rows flattened (row stride wp)
    w_ref: (KH, KW, Cin, TN)  weight slab for this Cout tile (bf16)
    b_ref: (1, TN)            bias (f32)
    o_ref: (1, Mo, TN)        flat output rows; the last KW-1 columns of every
                              image row are garbage and sliced off outside.

    out[m] = sum_{kh,kw} x[m + kh*wp + kw] @ w[kh, kw]   (bf16 MXU, f32 accum)
    """
    kh_n, kw_n = w_ref.shape[0], w_ref.shape[1]
    mo = o_ref.shape[1]
    acc = jnp.zeros((mo, o_ref.shape[2]), jnp.float32)
    for kh in range(kh_n):
        for kw in range(kw_n):
            xs = x_ref[0, pl.ds(kh * wp + kw, mo), :]      # static shifted window
            acc = acc + jnp.dot(xs, w_ref[kh, kw],
                                preferred_element_type=jnp.float32)
    res = acc + b_ref[...]
    if relu:
        res = jnp.maximum(res, 0.0)
    o_ref[0] = res.astype(o_ref.dtype)


def _matmul_bias_act_kernel(x_ref, w_ref, b_ref, o_ref, acc_ref, *, relu):
    """im2col fallback: (TM,TK)x(TK,TN) tile accumulated over the K grid axis."""
    k = pl.program_id(2)

    @pl.when(k == 0)
    def _init():
        acc_ref[...] = jnp.zeros_like(acc_ref)

    acc_ref[...] += jnp.dot(x_ref[...], w_ref[...],
                            preferred_element_type=jnp.float32)

    @pl.when(k == pl.num_programs(2) - 1)
    def _finalize():
        res = acc_ref[...] + b_ref[...]
        if relu:
            res = jnp.maximum(res, 0.0)
        o_ref[...] = res.astype(o_ref.dtype)


def _maxpool_kernel(x_ref, o_ref):
    """2x2 / stride-2 max-pool.  x_ref block: (TR, 2, Wo, 2*C) with the row
    pair in dim 1 and the column pair interleaved along the lane dim."""
    c = o_ref.shape[-1]
    t = x_ref[...]
    u = jnp.maximum(t[:, 0], t[:, 1])                  # max over the row pair
    o_ref[...] = jnp.maximum(u[..., :c], u[..., c:])   # max over the column pair


# ----------------------------- wrapped ops ---------------------------------

def _conv2d_fused(x, w, b, *, padding, relu):
    """Whole-image direct conv.  Returns (N, Ho, Wo, Coutp) bf16, or None when
    the image does not fit the VMEM budget (then the im2col path is used)."""
    N, H, W, Cin = x.shape
    KH, KW, _, Coutp = w.shape
    p = padding
    Ho = H + 2 * p - KH + 1
    Wo = W + 2 * p - KW + 1
    Wp = W + 2 * p
    extra_h = 1 if KW > 1 else 0          # one spare zero row so the widest
    Hq = H + 2 * p + extra_h              # in-kernel shift stays in bounds
    Lx = Hq * Wp
    Mo = Ho * Wp                          # flat output rows (KW-1 garbage cols/row)

    cin_pad = _round_up(Cin, 128)         # lane padding inside VMEM
    budget = int(0.45 * _vmem_limit_bytes())
    TN = None
    for tn in (512, 256, 128):
        if Coutp % tn:
            continue
        est = (2 * Lx * cin_pad * 2                 # x block, double buffered
               + 2 * KH * KW * cin_pad * tn * 2     # w block, double buffered
               + Mo * tn * 4                        # f32 accumulator value
               + 2 * Mo * tn * 2                    # out block, double buffered
               + 2 * tn * 4)
        if est <= budget:
            TN = tn
            break
    if TN is None:
        return None

    if p or extra_h:
        xq = jnp.pad(x, ((0, 0), (p, p + extra_h), (p, p), (0, 0)))
    else:
        xq = x
    xf = xq.reshape(N, Lx, Cin)           # metadata-only flatten of (Hq, Wp)

    out = pl.pallas_call(
        functools.partial(_conv_fused_kernel, wp=Wp, relu=relu),
        out_shape=jax.ShapeDtypeStruct((N, Mo, Coutp), jnp.bfloat16),
        grid=(N, Coutp // TN),
        in_specs=[
            pl.BlockSpec((1, Lx, Cin), lambda n, j: (n, 0, 0)),
            pl.BlockSpec((KH, KW, Cin, TN), lambda n, j: (0, 0, 0, j)),
            pl.BlockSpec((1, TN), lambda n, j: (0, j)),
        ],
        out_specs=pl.BlockSpec((1, Mo, TN), lambda n, j: (n, 0, j)),
        compiler_params=pltpu.CompilerParams(
            dimension_semantics=("parallel", "parallel"),
            vmem_limit_bytes=_vmem_limit_bytes(),
        ),
    )(xf, w, b)

    out = out.reshape(N, Ho, Wp, Coutp)[:, :, :Wo, :]
    return out


def _conv2d_im2col(x, w, b, *, padding, relu):
    """Tiled im2col matmul fallback (only for layers whose whole image does not
    fit the VMEM budget, i.e. very large-resolution early layers)."""
    N, H, W, Cin = x.shape
    KH, KW, _, Coutp = w.shape
    xp = x
    if padding:
        xp = jnp.pad(x, ((0, 0), (padding, padding), (padding, padding), (0, 0)))
    Hp, Wpd = xp.shape[1], xp.shape[2]
    Ho, Wo = Hp - KH + 1, Wpd - KW + 1

    cols = [xp[:, kh:kh + Ho, kw:kw + Wo, :]
            for kh in range(KH) for kw in range(KW)]
    patches = jnp.concatenate(cols, axis=-1).reshape(N * Ho * Wo, KH * KW * Cin)
    w2 = w.reshape(KH * KW * Cin, Coutp)

    M, K = patches.shape
    TN = 512 if Coutp % 512 == 0 else (256 if Coutp % 256 == 0 else 128)

    K_TILE_MAX = 2048
    if K <= K_TILE_MAX:
        nk, TK, Kp = 1, K, K
    else:
        TK = 0
        for cand in range(K_TILE_MAX, 127, -128):      # prefer an exact divisor
            if K % cand == 0:
                TK = cand
                break
        if TK:
            nk, Kp = K // TK, K
        else:
            nk = -(-K // K_TILE_MAX)
            TK = _round_up(-(-K // nk), 128)
            Kp = nk * TK

    Mp = _round_up(M, 16)
    TM = min(1024, Mp)
    Mp = _round_up(Mp, TM)

    if (Mp, Kp) != (M, K):
        patches = jnp.pad(patches, ((0, Mp - M), (0, Kp - K)))
    if Kp != K:
        w2 = jnp.pad(w2, ((0, Kp - K), (0, 0)))

    grid = (Mp // TM, Coutp // TN, nk)
    out = pl.pallas_call(
        functools.partial(_matmul_bias_act_kernel, relu=relu),
        out_shape=jax.ShapeDtypeStruct((Mp, Coutp), jnp.bfloat16),
        grid=grid,
        in_specs=[
            pl.BlockSpec((TM, TK), lambda i, j, k: (i, k)),
            pl.BlockSpec((TK, TN), lambda i, j, k: (k, j)),
            pl.BlockSpec((1, TN), lambda i, j, k: (0, j)),
        ],
        out_specs=pl.BlockSpec((TM, TN), lambda i, j, k: (i, j)),
        scratch_shapes=[pltpu.VMEM((TM, TN), jnp.float32)],
        compiler_params=pltpu.CompilerParams(
            dimension_semantics=("parallel", "parallel", "arbitrary"),
            vmem_limit_bytes=_vmem_limit_bytes(),
        ),
    )(patches, w2, b)

    return out[:M, :].reshape(N, Ho, Wo, Coutp)


def conv2d(x, w, b, *, cout, padding, relu):
    """Stride-1 Conv2d + bias (+ReLU) with pre-packed weights.
    x: (N,H,W,Cin); w: (KH,KW,Cin,Coutp) bf16 with Coutp = round_up(cout,128);
    b: (1,Coutp) f32.  Returns bf16 NHWC activations with `cout` channels."""
    x = x.astype(jnp.bfloat16)
    out = _conv2d_fused(x, w, b, padding=padding, relu=relu)
    if out is None:
        out = _conv2d_im2col(x, w, b, padding=padding, relu=relu)
    return out[..., :cout]


def maxpool2x2(x):
    """MaxPool2d(kernel_size=2, stride=2) on NHWC (H, W even, like this model).
    Input is read exactly once (metadata-only reshape, single-input kernel)."""
    N, H, W, C = x.shape
    Ho, Wo = H // 2, W // 2
    xr = x.reshape(N * Ho, 2, Wo, 2 * C)       # contiguous -> no copy
    M = N * Ho

    blk_bytes_per_row = (2 * Wo * 2 * C + Wo * C) * x.dtype.itemsize
    TR = 1
    for cand in (256, 128, 64, 32, 16, 8, 4, 2, 1):
        if M % cand == 0 and cand * blk_bytes_per_row <= 4 * 1024 * 1024:
            TR = cand
            break

    out = pl.pallas_call(
        _maxpool_kernel,
        out_shape=jax.ShapeDtypeStruct((M, Wo, C), x.dtype),
        grid=(M // TR,),
        in_specs=[pl.BlockSpec((TR, 2, Wo, 2 * C), lambda i: (i, 0, 0, 0))],
        out_specs=pl.BlockSpec((TR, Wo, C), lambda i: (i, 0, 0)),
        compiler_params=pltpu.CompilerParams(
            dimension_semantics=("parallel",)),
    )(xr)
    return out.reshape(N, Ho, Wo, C)


# ----------------------------- model definition ----------------------------

# Faithful to the PyTorch reference (note: 'Mconv7_stage6_L1' is duplicated and
# 'Mconv7_stage6_L2' is missing there -> the stage-6 L2 head DOES get a ReLU).
NO_RELU_LAYERS = [
    'conv5_5_CPM_L1', 'conv5_5_CPM_L2',
    'Mconv7_stage2_L1', 'Mconv7_stage2_L2',
    'Mconv7_stage3_L1', 'Mconv7_stage3_L2',
    'Mconv7_stage4_L1', 'Mconv7_stage4_L2',
    'Mconv7_stage5_L1', 'Mconv7_stage5_L2',
    'Mconv7_stage6_L1', 'Mconv7_stage6_L1',
]


def _make_layers_cfg(block):
    cfg = []
    for name, v in block.items():
        if 'pool' in name:
            assert v == [2, 2, 0]
            cfg.append(('pool', name))
        else:
            cin, cout, k, stride, pad = v
            assert stride == 1
            cfg.append(('conv', name, cin, cout, k, pad, name not in NO_RELU_LAYERS))
    return cfg


def build_model_cfg():
    blocks = OrderedDict()
    blocks['block0'] = OrderedDict([
        ('conv1_1', [3, 64, 3, 1, 1]), ('conv1_2', [64, 64, 3, 1, 1]),
        ('pool1_stage1', [2, 2, 0]),
        ('conv2_1', [64, 128, 3, 1, 1]), ('conv2_2', [128, 128, 3, 1, 1]),
        ('pool2_stage1', [2, 2, 0]),
        ('conv3_1', [128, 256, 3, 1, 1]), ('conv3_2', [256, 256, 3, 1, 1]),
        ('conv3_3', [256, 256, 3, 1, 1]), ('conv3_4', [256, 256, 3, 1, 1]),
        ('pool3_stage1', [2, 2, 0]),
        ('conv4_1', [256, 512, 3, 1, 1]), ('conv4_2', [512, 512, 3, 1, 1]),
        ('conv4_3_CPM', [512, 256, 3, 1, 1]), ('conv4_4_CPM', [256, 128, 3, 1, 1]),
    ])
    blocks['block1_1'] = OrderedDict([
        ('conv5_1_CPM_L1', [128, 128, 3, 1, 1]), ('conv5_2_CPM_L1', [128, 128, 3, 1, 1]),
        ('conv5_3_CPM_L1', [128, 128, 3, 1, 1]), ('conv5_4_CPM_L1', [128, 512, 1, 1, 0]),
        ('conv5_5_CPM_L1', [512, 38, 1, 1, 0]),
    ])
    blocks['block1_2'] = OrderedDict([
        ('conv5_1_CPM_L2', [128, 128, 3, 1, 1]), ('conv5_2_CPM_L2', [128, 128, 3, 1, 1]),
        ('conv5_3_CPM_L2', [128, 128, 3, 1, 1]), ('conv5_4_CPM_L2', [128, 512, 1, 1, 0]),
        ('conv5_5_CPM_L2', [512, 19, 1, 1, 0]),
    ])
    for i in range(2, 7):
        blocks['block%d_1' % i] = OrderedDict([
            ('Mconv1_stage%d_L1' % i, [185, 128, 7, 1, 3]),
            ('Mconv2_stage%d_L1' % i, [128, 128, 7, 1, 3]),
            ('Mconv3_stage%d_L1' % i, [128, 128, 7, 1, 3]),
            ('Mconv4_stage%d_L1' % i, [128, 128, 7, 1, 3]),
            ('Mconv5_stage%d_L1' % i, [128, 128, 7, 1, 3]),
            ('Mconv6_stage%d_L1' % i, [128, 128, 1, 1, 0]),
            ('Mconv7_stage%d_L1' % i, [128, 38, 1, 1, 0]),
        ])
        blocks['block%d_2' % i] = OrderedDict([
            ('Mconv1_stage%d_L2' % i, [185, 128, 7, 1, 3]),
            ('Mconv2_stage%d_L2' % i, [128, 128, 7, 1, 3]),
            ('Mconv3_stage%d_L2' % i, [128, 128, 7, 1, 3]),
            ('Mconv4_stage%d_L2' % i, [128, 128, 7, 1, 3]),
            ('Mconv5_stage%d_L2' % i, [128, 128, 7, 1, 3]),
            ('Mconv6_stage%d_L2' % i, [128, 128, 1, 1, 0]),
            ('Mconv7_stage%d_L2' % i, [128, 19, 1, 1, 0]),
        ])
    return OrderedDict((k, _make_layers_cfg(v)) for k, v in blocks.items())


def init_params(cfg, seed=0):
    """Deterministic He-style init for every conv (synthetic weights, like
    torch.nn.Conv2d default-ish init; the real model would load caffemodel)."""
    root = jax.random.PRNGKey(seed)
    params = OrderedDict()
    cnt = 0
    for bname, block in cfg.items():
        bp = []
        for layer in block:
            if layer[0] == 'pool':
                bp.append(None)
                continue
            _, _name, cin, cout, k, _pad, _relu = layer
            kw_ = jax.random.fold_in(root, cnt); cnt += 1
            kb_ = jax.random.fold_in(root, cnt); cnt += 1
            std = (2.0 / (cin * k * k)) ** 0.5
            w = jax.random.normal(kw_, (k, k, cin, cout), jnp.float32) * std
            b = jax.random.normal(kb_, (1, cout), jnp.float32) * 0.01
            bp.append((w, b))
        params[bname] = bp
    return params


def pack_conv(w, b):
    """Pack one conv's weights once: bf16 cast + lane-dense Cout zero-padding."""
    _, _, _, cout = w.shape
    coutp = _round_up(cout, 128)
    wp = jnp.pad(w, ((0, 0), (0, 0), (0, 0), (0, coutp - cout))).astype(jnp.bfloat16)
    bp = jnp.pad(b, ((0, 0), (0, coutp - cout))).astype(jnp.float32)
    return (wp, bp)


def pack_params(cfg, raw_params):
    """One-time weight prep hoisted out of the forward pass; also fuses the two
    sibling branches' first convs (conv5_1_CPM_L*, Mconv1_stage*_L*) along Cout
    so they run as a single matmul on the shared input."""
    del cfg  # static config is read from cfg at forward time, not carried here
    packed = {'block0': [pack_conv(*p) if p is not None else None
                         for p in raw_params['block0']]}
    for i in range(1, 7):
        pa = raw_params['block%d_1' % i]
        pb = raw_params['block%d_2' % i]
        (wa, ba), (wb, bb) = pa[0], pb[0]
        packed['pair%d' % i] = {
            'first': pack_conv(jnp.concatenate([wa, wb], axis=-1),
                               jnp.concatenate([ba, bb], axis=-1)),
            'a': [pack_conv(*p) for p in pa[1:]],
            'b': [pack_conv(*p) for p in pb[1:]],
        }
    return packed


# ----------------------------- forward pass ---------------------------------

def run_block(x, cfg_block, packed_block):
    for layer, p in zip(cfg_block, packed_block):
        if layer[0] == 'pool':
            x = maxpool2x2(x)
        else:
            _, _name, _cin, cout, _k, pad, relu = layer
            w, b = p
            x = conv2d(x, w, b, cout=cout, padding=pad, relu=relu)
    return x


def run_pair(x, cfg_a, cfg_b, packed_pair):
    """Two sibling branches whose first conv consumes the same input: that conv
    was fused along Cout at pack time; remaining layers run independently."""
    la, lb = cfg_a[0], cfg_b[0]
    assert la[0] == 'conv' and lb[0] == 'conv'
    assert la[4:] == lb[4:]                      # same k / pad / relu
    ca, cb = la[3], lb[3]
    w, b = packed_pair['first']
    y = conv2d(x, w, b, cout=ca + cb, padding=la[5], relu=la[6])
    ya = run_block(y[..., :ca], cfg_a[1:], packed_pair['a'])
    yb = run_block(y[..., ca:], cfg_b[1:], packed_pair['b'])
    return ya, yb


def bodypose_forward(packed, x_nchw, *, cfg):
    x = jnp.transpose(x_nchw, (0, 2, 3, 1)).astype(jnp.bfloat16)   # NCHW -> NHWC
    out1 = run_block(x, cfg['block0'], packed['block0'])
    o_1, o_2 = run_pair(out1, cfg['block1_1'], cfg['block1_2'], packed['pair1'])
    out_cat = jnp.concatenate([o_1, o_2, out1], axis=-1)
    for i in range(2, 7):
        o_1, o_2 = run_pair(out_cat, cfg['block%d_1' % i], cfg['block%d_2' % i],
                            packed['pair%d' % i])
        if i < 6:
            out_cat = jnp.concatenate([o_1, o_2, out1], axis=-1)
    # back to NCHW f32 like the PyTorch module's (out6_1, out6_2)
    return (jnp.transpose(o_1, (0, 3, 1, 2)).astype(jnp.float32),
            jnp.transpose(o_2, (0, 3, 1, 2)).astype(jnp.float32))


# ------------------------------------ main ----------------------------------

if __name__ == "__main__":
    cfg = build_model_cfg()
    raw_params = init_params(cfg, seed=0)
    packed = pack_params(cfg, raw_params)

    # ---- small self-checks of the Pallas conv / pool vs plain XLA ----------
    def _ref_conv(x, w, b, padding, relu):
        out = jax.lax.conv_general_dilated(
            x.astype(jnp.float32), w.astype(jnp.float32),
            window_strides=(1, 1),
            padding=[(padding, padding), (padding, padding)],
            dimension_numbers=('NHWC', 'HWIO', 'NHWC'))
        out = out + b.reshape(1, 1, 1, -1).astype(jnp.float32)
        if relu:
            out = jnp.maximum(out, 0.0)
        return out

    chk = jax.random.PRNGKey(1)
    for (ks, pad, cin, cout, relu) in [(3, 1, 64, 128, True),
                                       (7, 3, 32, 128, True),
                                       (1, 0, 128, 38, False)]:
        k0, k1, k2, chk = jax.random.split(chk, 4)
        xt = jax.random.normal(k0, (2, 12, 12, cin), jnp.float32)
        wt = jax.random.normal(k1, (ks, ks, cin, cout), jnp.float32) * 0.05
        bt = jax.random.normal(k2, (1, cout), jnp.float32) * 0.1
        wp_, bp_ = pack_conv(wt, bt)
        got = conv2d(xt, wp_, bp_, cout=cout, padding=pad, relu=relu)
        ref = _ref_conv(xt.astype(jnp.bfloat16), wt.astype(jnp.bfloat16), bt,
                        pad, relu)
        scale = float(jnp.max(jnp.abs(ref))) + 1e-6
        err = float(jnp.max(jnp.abs(got.astype(jnp.float32) - ref))) / scale
        assert err < 3e-2, ("conv mismatch", ks, pad, err)

    kx, chk = jax.random.split(chk)
    xm = jax.random.normal(kx, (2, 8, 8, 64), jnp.float32).astype(jnp.bfloat16)
    got = maxpool2x2(xm)
    ref = jnp.max(xm.astype(jnp.float32).reshape(2, 4, 2, 4, 2, 64), axis=(2, 4))
    assert float(jnp.max(jnp.abs(got.astype(jnp.float32) - ref))) < 1e-5

    # ---- full forward -------------------------------------------------------
    key = jax.random.PRNGKey(0)
    x = jax.random.normal(key, (2, 3, 32, 32), jnp.float32)   # NCHW, like PyTorch

    fwd = jax.jit(functools.partial(bodypose_forward, cfg=cfg))
    out6_1, out6_2 = fwd(packed, x)
    jax.block_until_ready((out6_1, out6_2))

    # 32x32 input -> three 2x2 maxpools -> 4x4 spatial; 38 PAF / 19 heatmap chans
    assert out6_1.shape == (2, 38, 4, 4), out6_1.shape
    assert out6_2.shape == (2, 19, 4, 4), out6_2.shape
    print("KERNEL_OK")
</pallas_src>

<mosaic_0001>
module attributes {stable_mosaic.version = 11 : i64} {
  func.func @_conv_fused_kernel(%arg0: i32, %arg1: i32, %arg2: memref<1x210x64xbf16, #tpu.memory_space<vmem>>, %arg3: memref<3x3x64x128xbf16, #tpu.memory_space<vmem>>, %arg4: memref<1x128xf32, #tpu.memory_space<vmem>>, %arg5: memref<1x168x128xbf16, #tpu.memory_space<vmem>>) attributes {dimension_semantics = [#tpu.dimension_semantics<parallel>, #tpu.dimension_semantics<parallel>], iteration_bounds = array<i64: 2, 1>, scalar_prefetch = 0 : i64, scratch_operands = 0 : i64, tpu.core_type = #tpu.core_type<tc>, window_params = [{transform_indices = @transform_0, window_bounds = array<i64: 1, 210, 64>}, {transform_indices = @transform_1, window_bounds = array<i64: 3, 3, 64, 128>}, {transform_indices = @transform_2, window_bounds = array<i64: 1, 128>}, {transform_indices = @transform_3, window_bounds = array<i64: 1, 168, 128>}]} {
    %cst = arith.constant 0.000000e+00 : f32
    %0 = vector.broadcast %cst : f32 to vector<168x128xf32>
    %c0 = arith.constant 0 : index
    %c0_0 = arith.constant 0 : index
    %c0_1 = arith.constant 0 : index
    %1 = vector.load %arg2[%c0, %c0_0, %c0_1] : memref<1x210x64xbf16, #tpu.memory_space<vmem>>, vector<1x168x64xbf16>
    %2 = vector.shape_cast %1 : vector<1x168x64xbf16> to vector<168x64xbf16>
    %c0_2 = arith.constant 0 : index
    %c0_3 = arith.constant 0 : index
    %c0_4 = arith.constant 0 : index
    %c0_5 = arith.constant 0 : index
    %3 = vector.load %arg3[%c0_2, %c0_3, %c0_4, %c0_5] : memref<3x3x64x128xbf16, #tpu.memory_space<vmem>>, vector<1x1x64x128xbf16>
    %4 = vector.shape_cast %3 : vector<1x1x64x128xbf16> to vector<64x128xbf16>
    %cst_6 = arith.constant dense<0.000000e+00> : vector<168x128xf32>
    %5 = tpu.matmul %2, %4, %cst_6 {dimension_numbers = #tpu.dot_dimension_numbers<[1], [0], [0], [1], [0, 0, 1, 1], [], []>} : vector<168x64xbf16>, vector<64x128xbf16>, vector<168x128xf32> -> vector<168x128xf32>
    %6 = arith.addf %0, %5 : vector<168x128xf32>
    %c0_7 = arith.constant 0 : index
    %c1 = arith.constant 1 : index
    %c0_8 = arith.constant 0 : index
    %7 = vector.load %arg2[%c0_7, %c1, %c0_8] : memref<1x210x64xbf16, #tpu.memory_space<vmem>>, vector<1x168x64xbf16>
    %8 = vector.shape_cast %7 : vector<1x168x64xbf16> to vector<168x64xbf16>
    %c0_9 = arith.constant 0 : index
    %c1_10 = arith.constant 1 : index
    %c0_11 = arith.constant 0 : index
    %c0_12 = arith.constant 0 : index
    %9 = vector.load %arg3[%c0_9, %c1_10, %c0_11, %c0_12] : memref<3x3x64x128xbf16, #tpu.memory_space<vmem>>, vector<1x1x64x128xbf16>
    %10 = vector.shape_cast %9 : vector<1x1x64x128xbf16> to vector<64x128xbf16>
    %cst_13 = arith.constant dense<0.000000e+00> : vector<168x128xf32>
    %11 = tpu.matmul %8, %10, %cst_13 {dimension_numbers = #tpu.dot_dimension_numbers<[1], [0], [0], [1], [0, 0, 1, 1], [], []>} : vector<168x64xbf16>, vector<64x128xbf16>, vector<168x128xf32> -> vector<168x128xf32>
    %12 = arith.addf %6, %11 : vector<168x128xf32>
    %c0_14 = arith.constant 0 : index
    %c2 = arith.constant 2 : index
    %c0_15 = arith.constant 0 : index
    %13 = vector.load %arg2[%c0_14, %c2, %c0_15] : memref<1x210x64xbf16, #tpu.memory_space<vmem>>, vector<1x168x64xbf16>
    %14 = vector.shape_cast %13 : vector<1x168x64xbf16> to vector<168x64xbf16>
    %c0_16 = arith.constant 0 : index
    %c2_17 = arith.constant 2 : index
    %c0_18 = arith.constant 0 : index
    %c0_19 = arith.constant 0 : index
    %15 = vector.load %arg3[%c0_16, %c2_17, %c0_18, %c0_19] : memref<3x3x64x128xbf16, #tpu.memory_space<vmem>>, vector<1x1x64x128xbf16>
    %16 = vector.shape_cast %15 : vector<1x1x64x128xbf16> to vector<64x128xbf16>
    %cst_20 = arith.constant dense<0.000000e+00> : vector<168x128xf32>
    %17 = tpu.matmul %14, %16, %cst_20 {dimension_numbers = #tpu.dot_dimension_numbers<[1], [0], [0], [1], [0, 0, 1, 1], [], []>} : vector<168x64xbf16>, vector<64x128xbf16>, vector<168x128xf32> -> vector<168x128xf32>
    %18 = arith.addf %12, %17 : vector<168x128xf32>
    %c0_21 = arith.constant 0 : index
    %c14 = arith.constant 14 : index
    %c0_22 = arith.constant 0 : index
    %19 = vector.load %arg2[%c0_21, %c14, %c0_22] : memref<1x210x64xbf16, #tpu.memory_space<vmem>>, vector<1x168x64xbf16>
    %20 = vector.shape_cast %19 : vector<1x168x64xbf16> to vector<168x64xbf16>
    %c1_23 = arith.constant 1 : index
    %c0_24 = arith.constant 0 : index
    %c0_25 = arith.constant 0 : index
    %c0_26 = arith.constant 0 : index
    %21 = vector.load %arg3[%c1_23, %c0_24, %c0_25, %c0_26] : memref<3x3x64x128xbf16, #tpu.memory_space<vmem>>, vector<1x1x64x128xbf16>
    %22 = vector.shape_cast %21 : vector<1x1x64x128xbf16> to vector<64x128xbf16>
    %cst_27 = arith.constant dense<0.000000e+00> : vector<168x128xf32>
    %23 = tpu.matmul %20, %22, %cst_27 {dimension_numbers = #tpu.dot_dimension_numbers<[1], [0], [0], [1], [0, 0, 1, 1], [], []>} : vector<168x64xbf16>, vector<64x128xbf16>, vector<168x128xf32> -> vector<168x128xf32>
    %24 = arith.addf %18, %23 : vector<168x128xf32>
    %c0_28 = arith.constant 0 : index
    %c15 = arith.constant 15 : index
    %c0_29 = arith.constant 0 : index
    %25 = vector.load %arg2[%c0_28, %c15, %c0_29] : memref<1x210x64xbf16, #tpu.memory_space<vmem>>, vector<1x168x64xbf16>
    %26 = vector.shape_cast %25 : vector<1x168x64xbf16> to vector<168x64xbf16>
    %c1_30 = arith.constant 1 : index
    %c1_31 = arith.constant 1 : index
    %c0_32 = arith.constant 0 : index
    %c0_33 = arith.constant 0 : index
    %27 = vector.load %arg3[%c1_30, %c1_31, %c0_32, %c0_33] : memref<3x3x64x128xbf16, #tpu.memory_space<vmem>>, vector<1x1x64x128xbf16>
    %28 = vector.shape_cast %27 : vector<1x1x64x128xbf16> to vector<64x128xbf16>
    %cst_34 = arith.constant dense<0.000000e+00> : vector<168x128xf32>
    %29 = tpu.matmul %26, %28, %cst_34 {dimension_numbers = #tpu.dot_dimension_numbers<[1], [0], [0], [1], [0, 0, 1, 1], [], []>} : vector<168x64xbf16>, vector<64x128xbf16>, vector<168x128xf32> -> vector<168x128xf32>
    %30 = arith.addf %24, %29 : vector<168x128xf32>
    %c0_35 = arith.constant 0 : index
    %c16 = arith.constant 16 : index
    %c0_36 = arith.constant 0 : index
    %31 = vector.load %arg2[%c0_35, %c16, %c0_36] : memref<1x210x64xbf16, #tpu.memory_space<vmem>>, vector<1x168x64xbf16>
    %32 = vector.shape_cast %31 : vector<1x168x64xbf16> to vector<168x64xbf16>
    %c1_37 = arith.constant 1 : index
    %c2_38 = arith.constant 2 : index
    %c0_39 = arith.constant 0 : index
    %c0_40 = arith.constant 0 : index
    %33 = vector.load %arg3[%c1_37, %c2_38, %c0_39, %c0_40] : memref<3x3x64x128xbf16, #tpu.memory_space<vmem>>, vector<1x1x64x128xbf16>
    %34 = vector.shape_cast %33 : vector<1x1x64x128xbf16> to vector<64x128xbf16>
    %cst_41 = arith.constant dense<0.000000e+00> : vector<168x128xf32>
    %35 = tpu.matmul %32, %34, %cst_41 {dimension_numbers = #tpu.dot_dimension_numbers<[1], [0], [0], [1], [0, 0, 1, 1], [], []>} : vector<168x64xbf16>, vector<64x128xbf16>, vector<168x128xf32> -> vector<168x128xf32>
    %36 = arith.addf %30, %35 : vector<168x128xf32>
    %c0_42 = arith.constant 0 : index
    %c28 = arith.constant 28 : index
    %c0_43 = arith.constant 0 : index
    %37 = vector.load %arg2[%c0_42, %c28, %c0_43] : memref<1x210x64xbf16, #tpu.memory_space<vmem>>, vector<1x168x64xbf16>
    %38 = vector.shape_cast %37 : vector<1x168x64xbf16> to vector<168x64xbf16>
    %c2_44 = arith.constant 2 : index
    %c0_45 = arith.constant 0 : index
    %c0_46 = arith.constant 0 : index
    %c0_47 = arith.constant 0 : index
    %39 = vector.load %arg3[%c2_44, %c0_45, %c0_46, %c0_47] : memref<3x3x64x128xbf16, #tpu.memory_space<vmem>>, vector<1x1x64x128xbf16>
    %40 = vector.shape_cast %39 : vector<1x1x64x128xbf16> to vector<64x128xbf16>
    %cst_48 = arith.constant dense<0.000000e+00> : vector<168x128xf32>
    %41 = tpu.matmul %38, %40, %cst_48 {dimension_numbers = #tpu.dot_dimension_numbers<[1], [0], [0], [1], [0, 0, 1, 1], [], []>} : vector<168x64xbf16>, vector<64x128xbf16>, vector<168x128xf32> -> vector<168x128xf32>
    %42 = arith.addf %36, %41 : vector<168x128xf32>
    %c0_49 = arith.constant 0 : index
    %c29 = arith.constant 29 : index
    %c0_50 = arith.constant 0 : index
    %43 = vector.load %arg2[%c0_49, %c29, %c0_50] : memref<1x210x64xbf16, #tpu.memory_space<vmem>>, vector<1x168x64xbf16>
    %44 = vector.shape_cast %43 : vector<1x168x64xbf16> to vector<168x64xbf16>
    %c2_51 = arith.constant 2 : index
    %c1_52 = arith.constant 1 : index
    %c0_53 = arith.constant 0 : index
    %c0_54 = arith.constant 0 : index
    %45 = vector.load %arg3[%c2_51, %c1_52, %c0_53, %c0_54] : memref<3x3x64x128xbf16, #tpu.memory_space<vmem>>, vector<1x1x64x128xbf16>
    %46 = vector.shape_cast %45 : vector<1x1x64x128xbf16> to vector<64x128xbf16>
    %cst_55 = arith.constant dense<0.000000e+00> : vector<168x128xf32>
    %47 = tpu.matmul %44, %46, %cst_55 {dimension_numbers = #tpu.dot_dimension_numbers<[1], [0], [0], [1], [0, 0, 1, 1], [], []>} : vector<168x64xbf16>, vector<64x128xbf16>, vector<168x128xf32> -> vector<168x128xf32>
    %48 = arith.addf %42, %47 : vector<168x128xf32>
    %c0_56 = arith.constant 0 : index
    %c30 = arith.constant 30 : index
    %c0_57 = arith.constant 0 : index
    %49 = vector.load %arg2[%c0_56, %c30, %c0_57] : memref<1x210x64xbf16, #tpu.memory_space<vmem>>, vector<1x168x64xbf16>
    %50 = vector.shape_cast %49 : vector<1x168x64xbf16> to vector<168x64xbf16>
    %c2_58 = arith.constant 2 : index
    %c2_59 = arith.constant 2 : index
    %c0_60 = arith.constant 0 : index
    %c0_61 = arith.constant 0 : index
    %51 = vector.load %arg3[%c2_58, %c2_59, %c0_60, %c0_61] : memref<3x3x64x128xbf16, #tpu.memory_space<vmem>>, vector<1x1x64x128xbf16>
    %52 = vector.shape_cast %51 : vector<1x1x64x128xbf16> to vector<64x128xbf16>
    %cst_62 = arith.constant dense<0.000000e+00> : vector<168x128xf32>
    %53 = tpu.matmul %50, %52, %cst_62 {dimension_numbers = #tpu.dot_dimension_numbers<[1], [0], [0], [1], [0, 0, 1, 1], [], []>} : vector<168x64xbf16>, vector<64x128xbf16>, vector<168x128xf32> -> vector<168x128xf32>
    %54 = arith.addf %48, %53 : vector<168x128xf32>
    %c0_63 = arith.constant 0 : index
    %c0_64 = arith.constant 0 : index
    %55 = vector.load %arg4[%c0_63, %c0_64] : memref<1x128xf32, #tpu.memory_space<vmem>>, vector<1x128xf32>
    %56 = vector.broadcast %55 : vector<1x128xf32> to vector<168x128xf32>
    %57 = arith.addf %54, %56 : vector<168x128xf32>
    %cst_65 = arith.constant 0.000000e+00 : f32
    %58 = vector.broadcast %cst_65 : f32 to vector<168x128xf32>
    %59 = arith.maximumf %57, %58 : vector<168x128xf32>
    %60 = arith.truncf %59 : vector<168x128xf32> to vector<168x128xbf16>
    %c0_66 = arith.constant 0 : index
    %c0_67 = arith.constant 0 : index
    %c0_68 = arith.constant 0 : index
    %61 = vector.load %arg5[%c0_66, %c0_67, %c0_68] : memref<1x168x128xbf16, #tpu.memory_space<vmem>>, vector<1x168x128xbf16>
    %62 = vector.shape_cast %61 : vector<1x168x128xbf16> to vector<168x128xbf16>
    %63 = vector.shape_cast %60 : vector<168x128xbf16> to vector<1x168x128xbf16>
    tpu.vector_store %arg5[%c0_66, %c0_67, %c0_68], %63 {strides = array<i32>} : memref<1x168x128xbf16, #tpu.memory_space<vmem>>, vector<1x168x128xbf16>,
    return
  }
  func.func @transform_0(%arg0: i32, %arg1: i32) -> (i32, i32, i32) {
    %c0_i32 = arith.constant 0 : i32
    %c0_i32_0 = arith.constant 0 : i32
    %c0_i32_1 = arith.constant 0 : i32
    return %arg0, %c0_i32, %c0_i32_0 : i32, i32, i32
  }
  func.func @transform_1(%arg0: i32, %arg1: i32) -> (i32, i32, i32, i32) {
    %c0_i32 = arith.constant 0 : i32
    %c0_i32_0 = arith.constant 0 : i32
    %c0_i32_1 = arith.constant 0 : i32
    %c0_i32_2 = arith.constant 0 : i32
    return %c0_i32, %c0_i32_0, %c0_i32_1, %arg1 : i32, i32, i32, i32
  }
  func.func @transform_2(%arg0: i32, %arg1: i32) -> (i32, i32) {
    %c0_i32 = arith.constant 0 : i32
    %c0_i32_0 = arith.constant 0 : i32
    return %c0_i32, %arg1 : i32, i32
  }
  func.func @transform_3(%arg0: i32, %arg1: i32) -> (i32, i32, i32) {
    %c0_i32 = arith.constant 0 : i32
    %c0_i32_0 = arith.constant 0 : i32
    return %arg0, %c0_i32, %arg1 : i32, i32, i32
  }
}

</mosaic_0001>

<llo_original>
// kernel: tpu_custom_call.1
$region0: #{tpu_custom_call.1}
  #allocation0 [shape = 'u32[]', space=smem, size = 0x4, offset = 0x4, fixed_abs, tag = 'smem constant byte address 0x4 - core index']
  #allocation1 [shape = 'u32[144,128]{1,0:T(1,128)}', space=vmem, size = 0x12000, scoped, tag = 'internal scratch']
  %s0 = inlined_call_operand.vmem [shape: bf16[2,210,64], index: 0, kind: input, shape index: {}]
  %s1 = inlined_call_operand.vmem [shape: bf16[3,3,64,128], index: 1, kind: input, shape index: {}]
  %s2 = inlined_call_operand.vmem [shape: f32[1,128], index: 2, kind: input, shape index: {}]
  %s3 = inlined_call_operand.hbm [shape: bf16[2,168,128], index: 3, kind: output, shape index: {}]
  %s4 = sld [smem:[#allocation0]]
  $region45: #{tpu_custom_call.1} parent=0
    _
  %s6 = ssub.s32 1, %s4
  %s7 = scalar_select 0, %s6, %s4
  $region1: #{tpu_custom_call.1} parent=0
    #allocation2 [shape = 'u8[86016]{0}', space=vmem, size = 0x15000, scoped, tag = 'output window, operand 0']
    #allocation3 [shape = 's32[2]{0}', space=sflag, size = 0x8, scoped, tag = 'scoped memory for tpu_custom_call.1']
    %8 = vsyncpa [#allocation3], 0
    %s9 = scalar_lea.sflag [#allocation3], 1
    %10 = vsyncpa %s9, 0
    loop: start=0, step=1, limit=4
    $region2: #{tpu_custom_call.1} parent=1 // loop_pre_header
      _
    $region3: #{tpu_custom_call.1} parent=1 // loop_header
      %s12 = sphi 0, %s16
      %p13 = scmp.ge.s32.totalorder %s12, 4
      %s19 = sphi 0, %s31
      %s20 = sphi 0, %s27
      %s21 = sphi 0, %s19
      %s22 = sphi 0, %s20
      %s23 = sphi 0, %s21
      %s24 = sphi 0, %s22
      %s34 = sphi 0, %s36
      %s37 = sphi 0, %s34
      %s38 = sphi 0, %s37
      %s54 = sphi 0, %s38
      %s60 = sphi 0, %s62
      %s63 = sphi 0, %s60
      %s64 = sphi 0, %s63
      %s80 = sphi 0, %s64
      %s86 = sphi 0, %s88
      %s89 = sphi 0, %s86
      %s90 = sphi 0, %s89
      %s106 = sphi 0, %s90
      %s114 = sphi 0, %s116
      %s117 = sphi 0, %s114
      %s118 = sphi 0, %s117
      %s134 = sphi 0, %s118
    $region4: #{tpu_custom_call.1} parent=1 // loop_header_branch
      %15 = sbr.rel (%p13) target = $region8
    $region5: #{tpu_custom_call.1} parent=1 // loop_body
      %s17 = ssub.s32 %s12, 1
      %s18 = ssub.s32 %s12, 2
      %s25 = sadd.s32 1, %s20
      %p26 = scmp.ge.s32.totalorder %s25, 1
      %s27 = scalar_select %p26, 0, %s25
      %s28 = sadd.s32 1, %s19
      %s29 = scalar_select %p26, %s28, %s19
      %p30 = scmp.ge.s32.totalorder %s29, 2
      %s31 = scalar_select %p30, 0, %s29
      %s32 = ssub.s32 %s19, %s31
      %p33 = scmp.eq.s32.totalorder %s32, 0
      %s35 = sadd.s32 %s34, 1
      %s36 = scalar_select %p33, %s34, %s35
      %p39 = pneg %p33
      %p40 = scmp.eq.s32.totalorder %s12, 1
      %p41 = por %p39, %p40
      %p42 = scmp.ne.s32.totalorder %s34, %s37
      %p43 = scmp.eq.s32.totalorder %s12, 0
      %p44 = por %p42, %p43
      %p45 = scmp.ne.s32.totalorder %s34, %s37
      %p46 = scmp.eq.s32.totalorder %s17, 1
      %p47 = por %p45, %p46
      %p48 = scmp.ne.s32.totalorder %s37, %s38
      %p49 = scmp.eq.s32.totalorder %s17, 0
      %p50 = por %p48, %p49
      %p51 = scmp.ne.s32.totalorder %s37, %s38
      %p52 = scmp.eq.s32.totalorder %s18, 1
      %p53 = por %p51, %p52
      %p55 = scmp.ne.s32.totalorder %s38, %s54
      %p56 = scmp.eq.s32.totalorder %s18, 0
      %p57 = por %p55, %p56
      %s58 = ssub.s32 %s20, %s27
      %p59 = scmp.eq.s32.totalorder %s58, 0
      %s61 = sadd.s32 %s60, 1
      %s62 = scalar_select %p59, %s60, %s61
      %p65 = pneg %p59
      %p66 = scmp.eq.s32.totalorder %s12, 1
      %p67 = por %p65, %p66
      %p68 = scmp.ne.s32.totalorder %s60, %s63
      %p69 = scmp.eq.s32.totalorder %s12, 0
      %p70 = por %p68, %p69
      %p71 = scmp.ne.s32.totalorder %s60, %s63
      %p72 = scmp.eq.s32.totalorder %s17, 1
      %p73 = por %p71, %p72
      %p74 = scmp.ne.s32.totalorder %s63, %s64
      %p75 = scmp.eq.s32.totalorder %s17, 0
      %p76 = por %p74, %p75
      %p77 = scmp.ne.s32.totalorder %s63, %s64
      %p78 = scmp.eq.s32.totalorder %s18, 1
      %p79 = por %p77, %p78
      %p81 = scmp.ne.s32.totalorder %s64, %s80
      %p82 = scmp.eq.s32.totalorder %s18, 0
      %p83 = por %p81, %p82
      %s84 = ssub.s32 %s20, %s27
      %p85 = scmp.eq.s32.totalorder %s84, 0
      %s87 = sadd.s32 %s86, 1
      %s88 = scalar_select %p85, %s86, %s87
      %p91 = pneg %p85
      %p92 = scmp.eq.s32.totalorder %s12, 1
      %p93 = por %p91, %p92
      %p94 = scmp.ne.s32.totalorder %s86, %s89
      %p95 = scmp.eq.s32.totalorder %s12, 0
      %p96 = por %p94, %p95
      %p97 = scmp.ne.s32.totalorder %s86, %s89
      %p98 = scmp.eq.s32.totalorder %s17, 1
      %p99 = por %p97, %p98
      %p100 = scmp.ne.s32.totalorder %s89, %s90
      %p101 = scmp.eq.s32.totalorder %s17, 0
      %p102 = por %p100, %p101
      %p103 = scmp.ne.s32.totalorder %s89, %s90
      %p104 = scmp.eq.s32.totalorder %s18, 1
      %p105 = por %p103, %p104
      %p107 = scmp.ne.s32.totalorder %s90, %s106
      %p108 = scmp.eq.s32.totalorder %s18, 0
      %p109 = por %p107, %p108
      %s110 = ssub.s32 %s19, %s31
      %s111 = ssub.s32 %s20, %s27
      %s112 = sor.u32 %s110, %s111
      %p113 = scmp.eq.s32.totalorder %s112, 0
      %s115 = sadd.s32 %s114, 1
      %s116 = scalar_select %p113, %s114, %s115
      %p119 = pneg %p113
      %p120 = scmp.eq.s32.totalorder %s12, 1
      %p121 = por %p119, %p120
      %p122 = scmp.ne.s32.totalorder %s114, %s117
      %p123 = scmp.eq.s32.totalorder %s12, 0
      %p124 = por %p122, %p123
      %p125 = scmp.ne.s32.totalorder %s114, %s117
      %p126 = scmp.eq.s32.totalorder %s17, 1
      %p127 = por %p125, %p126
      %p128 = scmp.ne.s32.totalorder %s117, %s118
      %p129 = scmp.eq.s32.totalorder %s17, 0
      %p130 = por %p128, %p129
      %p131 = scmp.ne.s32.totalorder %s117, %s118
      %p132 = scmp.eq.s32.totalorder %s18, 1
      %p133 = por %p131, %p132
      %p135 = scmp.ne.s32.totalorder %s118, %s134
      %p136 = scmp.eq.s32.totalorder %s18, 0
      %p137 = por %p135, %p136
      %p138 = scmp.le.s32.totalorder 1, %s12
      %p139 = scmp.lt.s32.totalorder %s12, 3
      %p140 = pnand %p138, %p139
      %p141 = pneg %p140
      // Predicated region
      $region9: #{tpu_custom_call.1} parent=5 // pred_check
        _
      $region10: #{tpu_custom_call.1} parent=5 // pred_check_branch
        %143 = sbr.rel (%p140) target = $region12
      $region11: #{tpu_custom_call.1} parent=5 // pred_region
        %s144 = ssub.s32 %s12, 1
        // Predicated region
        $region13: #{tpu_custom_call.1} parent=11 // pred_check
          %p145 = pneg %p76
        $region14: #{tpu_custom_call.1} parent=11 // pred_check_branch
          %147 = sbr.rel (%p145) target = $region16
        $region15: #{tpu_custom_call.1} parent=11 // pred_region
          %p148 = scmp.lt.s32.totalorder %s22, 0
          %s149 = scalar_select %p148, %s22, 0
          %s150 = smul.addr %s149, 4
          %s151 = scalar_lea.vmem %s1, %s150
        $region16: #{tpu_custom_call.1} parent=11 // pred_fallthru
          _
        // Predicated region
        $region17: #{tpu_custom_call.1} parent=11 // pred_check
          %p152 = pneg %p102
        $region18: #{tpu_custom_call.1} parent=11 // pred_check_branch
          %154 = sbr.rel (%p152) target = $region20
        $region19: #{tpu_custom_call.1} parent=11 // pred_region
          %p155 = scmp.lt.s32.totalorder %s22, 0
          %s156 = scalar_select %p155, %s22, 0
          %s157 = scalar_lea.vmem %s2, %s156
        $region20: #{tpu_custom_call.1} parent=11 // pred_fallthru
          _
      $region12: #{tpu_custom_call.1} parent=5 // pred_fallthru
        _
      %p158 = scmp.lt.s32.totalorder %s12, 2
      // Predicated region
      $region21: #{tpu_custom_call.1} parent=5 // pred_check
        %p159 = pneg %p158
      $region22: #{tpu_custom_call.1} parent=5 // pred_check_branch
        %161 = sbr.rel (%p159) target = $region24
      $region23: #{tpu_custom_call.1} parent=5 // pred_region
        // Predicated region
        $region25: #{tpu_custom_call.1} parent=23 // pred_check
          %p162 = pneg %p44
        $region26: #{tpu_custom_call.1} parent=23 // pred_check_branch
          %164 = sbr.rel (%p162) target = $region28
        $region27: #{tpu_custom_call.1} parent=23 // pred_region
          %p165 = scmp.lt.s32.totalorder %s19, 1
          %s166 = scalar_select %p165, %s19, 1
          %s167 = smul.addr %s166, 27
          %s168 = smul.addr %s167, 4
          %s169 = scalar_lea.vmem %s0, %s168
        $region28: #{tpu_custom_call.1} parent=23 // pred_fallthru
          _
      $region24: #{tpu_custom_call.1} parent=5 // pred_fallthru
        _
      %p170 = scmp.le.s32.totalorder 1, %s12
      %p171 = scmp.lt.s32.totalorder %s12, 3
      %p172 = pnand %p170, %p171
      %p173 = pneg %p172
      // Predicated region
      $region29: #{tpu_custom_call.1} parent=5 // pred_check
        _
      $region30: #{tpu_custom_call.1} parent=5 // pred_check_branch
        %175 = sbr.rel (%p172) target = $region32
      $region31: #{tpu_custom_call.1} parent=5 // pred_region
        %s176 = ssub.s32 %s12, 1
        %p177 = scmp.lt.s32.totalorder %s21, 1
        %s178 = scalar_select %p177, %s21, 1
        %s179 = smul.addr %s178, 27
        %s180 = smul.addr %s179, 4
        %s181 = scalar_lea.vmem %s0, %s180
        %p182 = pneg %p50
        %p183 = pneg %p47
        %p184 = scmp.lt.s32.totalorder %s22, 0
        %s185 = scalar_select %p184, %s22, 0
        %s186 = smul.addr %s185, 4
        %s187 = scalar_lea.vmem %s1, %s186
        %p188 = pneg %p76
        %p189 = pneg %p73
        %p190 = scmp.lt.s32.totalorder %s22, 0
        %s191 = scalar_select %p190, %s22, 0
        %s192 = scalar_lea.vmem %s2, %s191
        %p193 = pneg %p102
        %p194 = pneg %p99
        %p195 = pneg %p130
        %p196 = pneg %p127
        %s197 = sand.u32 %s117, 1
        %s198 = scalar_lea.sflag [#allocation3], %s197
        %s199 = sand.u32 %s117, 1
        %s200 = smul.addr %s199, 84
        %s201 = scalar_lea.vmem [#allocation2], %s200
        %p202 = scmp.lt.s32.totalorder %s21, 1
        %s203 = scalar_select %p202, %s21, 1
        %s204 = smul.addr %s203, 27
        %s205 = smul.addr %s204, 4
        %s206 = scalar_lea.vmem %s0, %s205
        %p207 = scmp.lt.s32.totalorder %s22, 0
        %s208 = scalar_select %p207, %s22, 0
        %s209 = smul.addr %s208, 4
        %s210 = scalar_lea.vmem %s1, %s209
        %p211 = scmp.lt.s32.totalorder %s22, 0
        %s212 = scalar_select %p211, %s22, 0
        %s213 = scalar_lea.vmem %s2, %s212
        %v215 = vld [vmem:[%s206] sm:$0xf]
        %v216 = vld [vmem:[%s206 + $0x4] sm:$0xf]
        %v217 = vld [vmem:[%s206 + $0x8] sm:$0xf]
        %v218 = vld [vmem:[%s206 + $0xc] sm:$0xf]
        %v219 = vld [vmem:[%s206 + $0x10] sm:$0xf]
        %v220 = vld [vmem:[%s206 + $0x14] sm:$0xf]
        %v221 = vld [vmem:[%s206 + $0x18] sm:$0xf]
        %v222 = vld [vmem:[%s206 + $0x1c] sm:$0xf]
        %v223 = vld [vmem:[%s206 + $0x20] sm:$0xf]
        %v224 = vld [vmem:[%s206 + $0x24] sm:$0xf]
        %v225 = vld [vmem:[%s206 + $0x28] sm:$0xf]
        %v226 = vld [vmem:[%s206 + $0x2c] sm:$0xf]
        %v227 = vld [vmem:[%s206 + $0x30] sm:$0xf]
        %v228 = vld [vmem:[%s206 + $0x34] sm:$0xf]
        %v229 = vld [vmem:[%s206 + $0x38] sm:$0xf]
        %v230 = vld [vmem:[%s206 + $0x3c] sm:$0xf]
        %v231 = vld [vmem:[%s206 + $0x40] sm:$0xf]
        %v232 = vld [vmem:[%s206 + $0x44] sm:$0xf]
        %v233 = vld [vmem:[%s206 + $0x48] sm:$0xf]
        %v234 = vld [vmem:[%s206 + $0x4c] sm:$0xf]
        %v235 = vld [vmem:[%s206 + $0x50] sm:$0xf]
        %v236 = vld [vmem:[%s210] sm:$0xf]
        %v237 = vld [vmem:[%s210 + $0x4] sm:$0xf]
        %v238 = vld [vmem:[%s210 + $0x8] sm:$0xf]
        %v239 = vld [vmem:[%s210 + $0xc] sm:$0xf]
        %v240 = vld [vmem:[%s210 + $0x10] sm:$0xf]
        %v241 = vld [vmem:[%s210 + $0x14] sm:$0xf]
        %v242 = vld [vmem:[%s210 + $0x18] sm:$0xf]
        %v243 = vld [vmem:[%s210 + $0x1c] sm:$0xf]
        %v244 = vld [vmem:[%s206 + $0x54] sm:$0x1]
        %s245 = scalar_lea.vmem %s210, 32
        %v246 = vld [vmem:[%s245] sm:$0xf]
        %v247 = vld [vmem:[%s245 + $0x4] sm:$0xf]
        %v248 = vld [vmem:[%s245 + $0x8] sm:$0xf]
        %v249 = vld [vmem:[%s245 + $0xc] sm:$0xf]
        %v250 = vld [vmem:[%s245 + $0x10] sm:$0xf]
        %v251 = vld [vmem:[%s245 + $0x14] sm:$0xf]
        %v252 = vld [vmem:[%s245 + $0x18] sm:$0xf]
        %v253 = vld [vmem:[%s245 + $0x1c] sm:$0xf]
        %v276 = vunpack.c.l.b16 %v215
        %v277 = vunpack.c.l.b16 %v216
        %v278 = vunpack.c.l.b16 %v217
        %v279 = vunpack.c.l.b16 %v218
        %v280 = vunpack.c.l.b16 %v219
        %v281 = vunpack.c.l.b16 %v220
        %v282 = vunpack.c.l.b16 %v221
        %v283 = vunpack.c.l.b16 %v222
        %v284 = vunpack.c.l.b16 %v223
        %v285 = vunpack.c.l.b16 %v224
        %v286 = vunpack.c.l.b16 %v225
        %v287 = vunpack.c.l.b16 %v226
        %v288 = vunpack.c.l.b16 %v227
        %v289 = vunpack.c.l.b16 %v228
        %v290 = vunpack.c.l.b16 %v229
        %v291 = vunpack.c.l.b16 %v230
        %v292 = vunpack.c.l.b16 %v231
        %v293 = vunpack.c.l.b16 %v232
        %v294 = vunpack.c.l.b16 %v233
        %v295 = vunpack.c.l.b16 %v234
        %v296 = vunpack.c.l.b16 %v235
        %v297 = vunpack.c.l.b16 %v244
        %v298 = vpack.c.b16 %v277, %v276
        %v299 = vpack.c.b16 %v279, %v278
        %v300 = vpack.c.b16 %v281, %v280
        %v301 = vpack.c.b16 %v283, %v282
        %v302 = vpack.c.b16 %v285, %v284
        %v303 = vpack.c.b16 %v287, %v286
        %v304 = vpack.c.b16 %v289, %v288
        %v305 = vpack.c.b16 %v291, %v290
        %v306 = vpack.c.b16 %v293, %v292
        %v307 = vpack.c.b16 %v295, %v294
        %v308 = vpack.c.b16 %v297, %v296
        %vm309 = vsmask.f32 7424
        %v311 = vshrl.u32 %v298, 16
        %v313 = vshll.u32 %v298, 16
        %v315 = vrot.slane %v313, 1
        %v316 = vor.u32 %v311, %v315
        %v318 = vshll.u32 %v299, 16
        %v320 = vrot.slane %v318, 1
        %v321 = vsel %vm309, %v316, %v320
        %v322 = vshrl.u32 %v299, 16
        %v324 = vor.u32 %v322, %v320
        %v326 = vshll.u32 %v300, 16
        %v328 = vrot.slane %v326, 1
        %v329 = vsel %vm309, %v324, %v328
        %v330 = vshrl.u32 %v300, 16
        %v332 = vor.u32 %v330, %v328
        %v334 = vshll.u32 %v301, 16
        %v336 = vrot.slane %v334, 1
        %v337 = vsel %vm309, %v332, %v336
        %v338 = vshrl.u32 %v301, 16
        %v340 = vor.u32 %v338, %v336
        %v342 = vshll.u32 %v302, 16
        %v344 = vrot.slane %v342, 1
        %v345 = vsel %vm309, %v340, %v344
        %v346 = vshrl.u32 %v302, 16
        %v348 = vor.u32 %v346, %v344
        %v350 = vshll.u32 %v303, 16
        %v352 = vrot.slane %v350, 1
        %v353 = vsel %vm309, %v348, %v352
        %v354 = vshrl.u32 %v303, 16
        %v356 = vor.u32 %v354, %v352
        %v358 = vshll.u32 %v304, 16
        %v360 = vrot.slane %v358, 1
        %v361 = vsel %vm309, %v356, %v360
        %v362 = vshrl.u32 %v304, 16
        %v364 = vor.u32 %v362, %v360
        %v366 = vshll.u32 %v305, 16
        %v368 = vrot.slane %v366, 1
        %v369 = vsel %vm309, %v364, %v368
        %v370 = vshrl.u32 %v305, 16
        %v372 = vor.u32 %v370, %v368
        %v374 = vshll.u32 %v306, 16
        %v376 = vrot.slane %v374, 1
        %v377 = vsel %vm309, %v372, %v376
        %v378 = vshrl.u32 %v306, 16
        %v380 = vor.u32 %v378, %v376
        %v382 = vshll.u32 %v307, 16
        %v384 = vrot.slane %v382, 1
        %v385 = vsel %vm309, %v380, %v384
        %v386 = vshrl.u32 %v307, 16
        %v388 = vor.u32 %v386, %v384
        %v390 = vshll.u32 %v308, 16
        %v392 = vrot.slane %v390, 1
        %v393 = vsel %vm309, %v388, %v392
        %v394 = vshrl.u32 %v308, 16
        %v396 = vor.u32 %v394, %v392
        %v405 = vunpack.c.l.b16 %v246
        %v406 = vunpack.c.l.b16 %v247
        %v407 = vunpack.c.l.b16 %v248
        %v408 = vunpack.c.l.b16 %v249
        %v409 = vunpack.c.l.b16 %v250
        %v410 = vunpack.c.l.b16 %v251
        %v411 = vunpack.c.l.b16 %v252
        %v412 = vunpack.c.l.b16 %v253
        %v413 = vpack.c.b16 %v406, %v405
        %v414 = vpack.c.b16 %v408, %v407
        %v415 = vpack.c.b16 %v410, %v409
        %v416 = vpack.c.b16 %v412, %v411
        %vm421 = vcmask 523264
        %v423 = vsel %vm421, %v321, 0
        %v426 = vsel %vm421, %v329, 0
        %v429 = vsel %vm421, %v337, 0
        %v432 = vsel %vm421, %v345, 0
        %v435 = vsel %vm421, %v353, 0
        %v438 = vsel %vm421, %v361, 0
        %v441 = vsel %vm421, %v369, 0
        %v444 = vsel %vm421, %v377, 0
        %v447 = vsel %vm421, %v385, 0
        %v450 = vsel %vm421, %v393, 0
        %v453 = vsel %vm421, %v396, 0
        %455 = vmatprep.subr.bf16.mxu0 0
        %456 = vmatpush1.bf16.msra.mxu0 %v413
        %457 = vmatprep.subr.bf16.mxu0 0
        %458 = vmatpush1.bf16.msra.mxu0 %v414
        %459 = vmatprep.subr.bf16.mxu0 0
        %460 = vmatpush1.bf16.msra.mxu0 %v415
        %461 = vmatprep.subr.bf16.mxu0 0
        %462 = vmatpush1.bf16.msra.mxu0 %v416
        %463 = vmatprep.subr.bf16.mxu0 0
        %464 = vmatpush1.bf16.msra.mxu0 0
        %465 = vmatprep.subr.bf16.mxu0 0
        %466 = vmatpush1.bf16.msra.mxu0 0
        %467 = vmatprep.subr.bf16.mxu0 0
        %468 = vmatpush1.bf16.msra.mxu0 0
        %469 = vmatprep.subr.bf16.mxu0 0
        %470 = vmatpush1.bf16.msra.mxu0 0
        %471 = vmatprep.subr.bf16.mxu0 0
        %472 = vmatpush1.bf16.msra.mxu0 0
        %473 = vmatprep.subr.bf16.mxu0 0
        %474 = vmatpush1.bf16.msra.mxu0 0
        %475 = vmatprep.subr.bf16.mxu0 0
        %476 = vmatpush1.bf16.msra.mxu0 0
        %477 = vmatprep.subr.bf16.mxu0 0
        %478 = vmatpush1.bf16.msra.mxu0 0
        %479 = vmatprep.subr.bf16.mxu0 0
        %480 = vmatpush1.bf16.msra.mxu0 0
        %481 = vmatprep.subr.bf16.mxu0 0
        %482 = vmatpush1.bf16.msra.mxu0 0
        %483 = vmatprep.subr.bf16.mxu0 0
        %484 = vmatpush1.bf16.msra.mxu0 0
        %485 = vmatprep.subr.bf16.mxu0 0
        %486 = vmatpush1.bf16.msra.mxu0 0
        %487 = vmatprep.mubr.bf16.mxu0 0
        %488 = vmatmul.mubr.bf16.gmra.mrb[0].mxu0 %v423
        %v489 = vpop.f32.mrb[0].mxu0
        %v490 = vadd.f32 0.0, %v489
        %v491 = vpop.f32.mrb[0].mxu0
        %v492 = vpop.f32.mrb[0].mxu0
        %v493 = vadd.f32 0.0, %v492
        %v494 = vpop.f32.mrb[0].mxu0
        %495 = vmatprep.mubr.bf16.mxu0 0
        %496 = vmatmul.mubr.bf16.gmra.mrb[0].mxu0 %v426
        %v497 = vpop.f32.mrb[0].mxu0
        %v498 = vadd.f32 0.0, %v497
        %v499 = vpop.f32.mrb[0].mxu0
        %v500 = vpop.f32.mrb[0].mxu0
        %v501 = vadd.f32 0.0, %v500
        %v502 = vpop.f32.mrb[0].mxu0
        %503 = vmatprep.mubr.bf16.mxu0 0
        %504 = vmatmul.mubr.bf16.gmra.mrb[0].mxu0 %v429
        %v505 = vpop.f32.mrb[0].mxu0
        %v506 = vadd.f32 0.0, %v505
        %v507 = vpop.f32.mrb[0].mxu0
        %v508 = vpop.f32.mrb[0].mxu0
        %v509 = vadd.f32 0.0, %v508
        %v510 = vpop.f32.mrb[0].mxu0
        %511 = vmatprep.mubr.bf16.mxu0 0
        %512 = vmatmul.mubr.bf16.gmra.mrb[0].mxu0 %v432
        %v513 = vpop.f32.mrb[0].mxu0
        %v514 = vadd.f32 0.0, %v513
        %v515 = vpop.f32.mrb[0].mxu0
        %v516 = vpop.f32.mrb[0].mxu0
        %v517 = vadd.f32 0.0, %v516
        %v518 = vpop.f32.mrb[0].mxu0
        %519 = vmatprep.mubr.bf16.mxu0 0
        %520 = vmatmul.mubr.bf16.gmra.mrb[0].mxu0 %v435
        %v521 = vpop.f32.mrb[0].mxu0
        %v522 = vadd.f32 0.0, %v521
        %v523 = vpop.f32.mrb[0].mxu0
        %v524 = vpop.f32.mrb[0].mxu0
        %v525 = vadd.f32 0.0, %v524
        %v526 = vpop.f32.mrb[0].mxu0
        %527 = vmatprep.mubr.bf16.mxu0 0
        %528 = vmatmul.mubr.bf16.gmra.mrb[0].mxu0 %v438
        %v529 = vpop.f32.mrb[0].mxu0
        %v530 = vadd.f32 0.0, %v529
        %v531 = vpop.f32.mrb[0].mxu0
        %v532 = vpop.f32.mrb[0].mxu0
        %v533 = vadd.f32 0.0, %v532
        %v534 = vpop.f32.mrb[0].mxu0
        %535 = vmatprep.mubr.bf16.mxu0 0
        %536 = vmatmul.mubr.bf16.gmra.mrb[0].mxu0 %v441
        %v537 = vpop.f32.mrb[0].mxu0
        %v538 = vadd.f32 0.0, %v537
        %v539 = vpop.f32.mrb[0].mxu0
        %v540 = vpop.f32.mrb[0].mxu0
        %v541 = vadd.f32 0.0, %v540
        %v542 = vpop.f32.mrb[0].mxu0
        %543 = vmatprep.mubr.bf16.mxu0 0
        %544 = vmatmul.mubr.bf16.gmra.mrb[0].mxu0 %v444
        %v545 = vpop.f32.mrb[0].mxu0
        %v546 = vadd.f32 0.0, %v545
        %v547 = vpop.f32.mrb[0].mxu0
        %v548 = vpop.f32.mrb[0].mxu0
        %v549 = vadd.f32 0.0, %v548
        %v550 = vpop.f32.mrb[0].mxu0
        %551 = vmatprep.mubr.bf16.mxu0 0
        %552 = vmatmul.mubr.bf16.gmra.mrb[0].mxu0 %v447
        %v553 = vpop.f32.mrb[0].mxu0
        %v554 = vadd.f32 0.0, %v553
        %v555 = vpop.f32.mrb[0].mxu0
        %v556 = vpop.f32.mrb[0].mxu0
        %v557 = vadd.f32 0.0, %v556
        %v558 = vpop.f32.mrb[0].mxu0
        %559 = vmatprep.mubr.bf16.mxu0 0
        %560 = vmatmul.mubr.bf16.gmra.mrb[0].mxu0 %v450
        %v561 = vpop.f32.mrb[0].mxu0
        %v562 = vadd.f32 0.0, %v561
        %v563 = vpop.f32.mrb[0].mxu0
        %v564 = vpop.f32.mrb[0].mxu0
        %v565 = vadd.f32 0.0, %v564
        %v566 = vpop.f32.mrb[0].mxu0
        %567 = vmatprep.mubr.bf16.mxu0 0
        %568 = vmatmul.mubr.bf16.gmra.mrb[0].mxu0 %v453
        %v569 = vpop.f32.mrb[0].mxu0
        %v570 = vadd.f32 0.0, %v569
        %v571 = vpop.f32.mrb[0].mxu0
        %v572 = vpop.f32.mrb[0].mxu0
        %v573 = vpop.f32.mrb[0].mxu0
        %574 = vdwg.mxu0
        %v575 = vpack.c.b16 %v296, %v296
        %v584 = vunpack.c.l.b16 %v236
        %v585 = vunpack.c.l.b16 %v237
        %v586 = vunpack.c.l.b16 %v238
        %v587 = vunpack.c.l.b16 %v239
        %v588 = vunpack.c.l.b16 %v240
        %v589 = vunpack.c.l.b16 %v241
        %v590 = vunpack.c.l.b16 %v242
        %v591 = vunpack.c.l.b16 %v243
        %v592 = vpack.c.b16 %v585, %v584
        %v593 = vpack.c.b16 %v587, %v586
        %v594 = vpack.c.b16 %v589, %v588
        %v595 = vpack.c.b16 %v591, %v590
        %v600 = vsel %vm421, %v298, 0
        %v602 = vsel %vm421, %v299, 0
        %v604 = vsel %vm421, %v300, 0
        %v606 = vsel %vm421, %v301, 0
        %v608 = vsel %vm421, %v302, 0
        %v610 = vsel %vm421, %v303, 0
        %v612 = vsel %vm421, %v304, 0
        %v614 = vsel %vm421, %v305, 0
        %v616 = vsel %vm421, %v306, 0
        %v618 = vsel %vm421, %v307, 0
        %v621 = vsel %vm421, %v575, 0
        %623 = vmatprep.subr.bf16.mxu0 0
        %624 = vmatpush1.bf16.msra.mxu0 %v592
        %625 = vmatprep.subr.bf16.mxu0 0
        %626 = vmatpush1.bf16.msra.mxu0 %v593
        %627 = vmatprep.subr.bf16.mxu0 0
        %628 = vmatpush1.bf16.msra.mxu0 %v594
        %629 = vmatprep.subr.bf16.mxu0 0
        %630 = vmatpush1.bf16.msra.mxu0 %v595
        %631 = vmatprep.subr.bf16.mxu0 0
        %632 = vmatpush1.bf16.msra.mxu0 0
        %633 = vmatprep.subr.bf16.mxu0 0
        %634 = vmatpush1.bf16.msra.mxu0 0
        %635 = vmatprep.subr.bf16.mxu0 0
        %636 = vmatpush1.bf16.msra.mxu0 0
        %637 = vmatprep.subr.bf16.mxu0 0
        %638 = vmatpush1.bf16.msra.mxu0 0
        %639 = vmatprep.subr.bf16.mxu0 0
        %640 = vmatpush1.bf16.msra.mxu0 0
        %641 = vmatprep.subr.bf16.mxu0 0
        %642 = vmatpush1.bf16.msra.mxu0 0
        %643 = vmatprep.subr.bf16.mxu0 0
        %644 = vmatpush1.bf16.msra.mxu0 0
        %645 = vmatprep.subr.bf16.mxu0 0
        %646 = vmatpush1.bf16.msra.mxu0 0
        %647 = vmatprep.subr.bf16.mxu0 0
        %648 = vmatpush1.bf16.msra.mxu0 0
        %649 = vmatprep.subr.bf16.mxu0 0
        %650 = vmatpush1.bf16.msra.mxu0 0
        %651 = vmatprep.subr.bf16.mxu0 0
        %652 = vmatpush1.bf16.msra.mxu0 0
        %653 = vmatprep.subr.bf16.mxu0 0
        %654 = vmatpush1.bf16.msra.mxu0 0
        %655 = vmatprep.mubr.bf16.mxu0 0
        %656 = vmatmul.mubr.bf16.gmra.mrb[0].mxu0 %v600
        %v657 = vpop.f32.mrb[0].mxu0
        %v658 = vadd.f32 %v490, %v657
        %v659 = vpop.f32.mrb[0].mxu0
        %v660 = vpop.f32.mrb[0].mxu0
        %v661 = vadd.f32 %v493, %v660
        %v662 = vpop.f32.mrb[0].mxu0
        %663 = vmatprep.mubr.bf16.mxu0 0
        %664 = vmatmul.mubr.bf16.gmra.mrb[0].mxu0 %v602
        %v665 = vpop.f32.mrb[0].mxu0
        %v666 = vadd.f32 %v498, %v665
        %v667 = vpop.f32.mrb[0].mxu0
        %v668 = vpop.f32.mrb[0].mxu0
        %v669 = vadd.f32 %v501, %v668
        %v670 = vpop.f32.mrb[0].mxu0
        %671 = vmatprep.mubr.bf16.mxu0 0
        %672 = vmatmul.mubr.bf16.gmra.mrb[0].mxu0 %v604
        %v673 = vpop.f32.mrb[0].mxu0
        %v674 = vadd.f32 %v506, %v673
        %v675 = vpop.f32.mrb[0].mxu0
        %v676 = vpop.f32.mrb[0].mxu0
        %v677 = vadd.f32 %v509, %v676
        %v678 = vpop.f32.mrb[0].mxu0
        %679 = vmatprep.mubr.bf16.mxu0 0
        %680 = vmatmul.mubr.bf16.gmra.mrb[0].mxu0 %v606
        %v681 = vpop.f32.mrb[0].mxu0
        %v682 = vadd.f32 %v514, %v681
        %v683 = vpop.f32.mrb[0].mxu0
        %v684 = vpop.f32.mrb[0].mxu0
        %v685 = vadd.f32 %v517, %v684
        %v686 = vpop.f32.mrb[0].mxu0
        %687 = vmatprep.mubr.bf16.mxu0 0
        %688 = vmatmul.mubr.bf16.gmra.mrb[0].mxu0 %v608
        %v689 = vpop.f32.mrb[0].mxu0
        %v690 = vadd.f32 %v522, %v689
        %v691 = vpop.f32.mrb[0].mxu0
        %v692 = vpop.f32.mrb[0].mxu0
        %v693 = vadd.f32 %v525, %v692
        %v694 = vpop.f32.mrb[0].mxu0
        %695 = vmatprep.mubr.bf16.mxu0 0
        %696 = vmatmul.mubr.bf16.gmra.mrb[0].mxu0 %v610
        %v697 = vpop.f32.mrb[0].mxu0
        %v698 = vadd.f32 %v530, %v697
        %v699 = vpop.f32.mrb[0].mxu0
        %v700 = vpop.f32.mrb[0].mxu0
        %v701 = vadd.f32 %v533, %v700
        %v702 = vpop.f32.mrb[0].mxu0
        %703 = vmatprep.mubr.bf16.mxu0 0
        %704 = vmatmul.mubr.bf16.gmra.mrb[0].mxu0 %v612
        %v705 = vpop.f32.mrb[0].mxu0
        %v706 = vadd.f32 %v538, %v705
        %v707 = vpop.f32.mrb[0].mxu0
        %v708 = vpop.f32.mrb[0].mxu0
        %v709 = vadd.f32 %v541, %v708
        %v710 = vpop.f32.mrb[0].mxu0
        %711 = vmatprep.mubr.bf16.mxu0 0
        %712 = vmatmul.mubr.bf16.gmra.mrb[0].mxu0 %v614
        %v713 = vpop.f32.mrb[0].mxu0
        %v714 = vadd.f32 %v546, %v713
        %v715 = vpop.f32.mrb[0].mxu0
        %v716 = vpop.f32.mrb[0].mxu0
        %v717 = vadd.f32 %v549, %v716
        %v718 = vpop.f32.mrb[0].mxu0
        %719 = vmatprep.mubr.bf16.mxu0 0
        %720 = vmatmul.mubr.bf16.gmra.mrb[0].mxu0 %v616
        %v721 = vpop.f32.mrb[0].mxu0
        %v722 = vadd.f32 %v554, %v721
        %v723 = vpop.f32.mrb[0].mxu0
        %v724 = vpop.f32.mrb[0].mxu0
        %v725 = vadd.f32 %v557, %v724
        %v726 = vpop.f32.mrb[0].mxu0
        %727 = vmatprep.mubr.bf16.mxu0 0
        %728 = vmatmul.mubr.bf16.gmra.mrb[0].mxu0 %v618
        %v729 = vpop.f32.mrb[0].mxu0
        %v730 = vadd.f32 %v562, %v729
        %v731 = vpop.f32.mrb[0].mxu0
        %v732 = vpop.f32.mrb[0].mxu0
        %v733 = vadd.f32 %v565, %v732
        %v734 = vpop.f32.mrb[0].mxu0
        %735 = vmatprep.mubr.bf16.mxu0 0
        %736 = vmatmul.mubr.bf16.gmra.mrb[0].mxu0 %v621
        %v737 = vpop.f32.mrb[0].mxu0
        %v738 = vadd.f32 %v570, %v737
        %v739 = vpop.f32.mrb[0].mxu0
        %v740 = vpop.f32.mrb[0].mxu0
        %v741 = vpop.f32.mrb[0].mxu0
        %742 = vdwg.mxu0
        %v743 = vld [vmem:[%s206] sm:$0xe]
        %s744 = scalar_lea.vmem %s210, 64
        %v745 = vld [vmem:[%s744] sm:$0xf]
        %v746 = vld [vmem:[%s744 + $0x4] sm:$0xf]
        %v747 = vld [vmem:[%s744 + $0x8] sm:$0xf]
        %v748 = vld [vmem:[%s744 + $0xc] sm:$0xf]
        %v749 = vld [vmem:[%s744 + $0x10] sm:$0xf]
        %v750 = vld [vmem:[%s744 + $0x14] sm:$0xf]
        %v751 = vld [vmem:[%s744 + $0x18] sm:$0xf]
        %v752 = vld [vmem:[%s744 + $0x1c] sm:$0xf]
        %v754 = vunpack.c.l.b16 %v743
        %v755 = vpack.c.b16 %v277, %v754
        %vm756 = vcmask 1046528
        %v757 = vrot.slane %v755, 1
        %v758 = vrot.slane %v299, 1
        %v759 = vsel %vm756, %v757, %v758
        %v760 = vrot.slane %v300, 1
        %v761 = vsel %vm756, %v758, %v760
        %v762 = vrot.slane %v301, 1
        %v763 = vsel %vm756, %v760, %v762
        %v764 = vrot.slane %v302, 1
        %v765 = vsel %vm756, %v762, %v764
        %v766 = vrot.slane %v303, 1
        %v767 = vsel %vm756, %v764, %v766
        %v768 = vrot.slane %v304, 1
        %v769 = vsel %vm756, %v766, %v768
        %v770 = vrot.slane %v305, 1
        %v771 = vsel %vm756, %v768, %v770
        %v772 = vrot.slane %v306, 1
        %v773 = vsel %vm756, %v770, %v772
        %v774 = vrot.slane %v307, 1
        %v775 = vsel %vm756, %v772, %v774
        %v776 = vrot.slane %v308, 1
        %v777 = vsel %vm756, %v774, %v776
        %v786 = vunpack.c.l.b16 %v745
        %v787 = vunpack.c.l.b16 %v746
        %v788 = vunpack.c.l.b16 %v747
        %v789 = vunpack.c.l.b16 %v748
        %v790 = vunpack.c.l.b16 %v749
        %v791 = vunpack.c.l.b16 %v750
        %v792 = vunpack.c.l.b16 %v751
        %v793 = vunpack.c.l.b16 %v752
        %v794 = vpack.c.b16 %v787, %v786
        %v795 = vpack.c.b16 %v789, %v788
        %v796 = vpack.c.b16 %v791, %v790
        %v797 = vpack.c.b16 %v793, %v792
        %v803 = vsel %vm421, %v759, 0
        %v806 = vsel %vm421, %v761, 0
        %v809 = vsel %vm421, %v763, 0
        %v812 = vsel %vm421, %v765, 0
        %v815 = vsel %vm421, %v767, 0
        %v818 = vsel %vm421, %v769, 0
        %v821 = vsel %vm421, %v771, 0
        %v824 = vsel %vm421, %v773, 0
        %v827 = vsel %vm421, %v775, 0
        %v830 = vsel %vm421, %v777, 0
        %v833 = vsel %vm421, %v776, 0
        %835 = vmatprep.subr.bf16.mxu0 0
        %836 = vmatpush1.bf16.msra.mxu0 %v794
        %837 = vmatprep.subr.bf16.mxu0 0
        %838 = vmatpush1.bf16.msra.mxu0 %v795
        %839 = vmatprep.subr.bf16.mxu0 0
        %840 = vmatpush1.bf16.msra.mxu0 %v796
        %841 = vmatprep.subr.bf16.mxu0 0
        %842 = vmatpush1.bf16.msra.mxu0 %v797
        %843 = vmatprep.subr.bf16.mxu0 0
        %844 = vmatpush1.bf16.msra.mxu0 0
        %845 = vmatprep.subr.bf16.mxu0 0
        %846 = vmatpush1.bf16.msra.mxu0 0
        %847 = vmatprep.subr.bf16.mxu0 0
        %848 = vmatpush1.bf16.msra.mxu0 0
        %849 = vmatprep.subr.bf16.mxu0 0
        %850 = vmatpush1.bf16.msra.mxu0 0
        %851 = vmatprep.subr.bf16.mxu0 0
        %852 = vmatpush1.bf16.msra.mxu0 0
        %853 = vmatprep.subr.bf16.mxu0 0
        %854 = vmatpush1.bf16.msra.mxu0 0
        %855 = vmatprep.subr.bf16.mxu0 0
        %856 = vmatpush1.bf16.msra.mxu0 0
        %857 = vmatprep.subr.bf16.mxu0 0
        %858 = vmatpush1.bf16.msra.mxu0 0
        %859 = vmatprep.subr.bf16.mxu0 0
        %860 = vmatpush1.bf16.msra.mxu0 0
        %861 = vmatprep.subr.bf16.mxu0 0
        %862 = vmatpush1.bf16.msra.mxu0 0
        %863 = vmatprep.subr.bf16.mxu0 0
        %864 = vmatpush1.bf16.msra.mxu0 0
        %865 = vmatprep.subr.bf16.mxu0 0
        %866 = vmatpush1.bf16.msra.mxu0 0
        %867 = vmatprep.mubr.bf16.mxu0 0
        %868 = vmatmul.mubr.bf16.gmra.mrb[0].mxu0 %v803
        %v869 = vpop.f32.mrb[0].mxu0
        %v870 = vadd.f32 0.0, %v869
        %v871 = vpop.f32.mrb[0].mxu0
        %v872 = vpop.f32.mrb[0].mxu0
        %v873 = vadd.f32 0.0, %v872
        %v874 = vpop.f32.mrb[0].mxu0
        %875 = vmatprep.mubr.bf16.mxu0 0
        %876 = vmatmul.mubr.bf16.gmra.mrb[0].mxu0 %v806
        %v877 = vpop.f32.mrb[0].mxu0
        %v878 = vadd.f32 0.0, %v877
        %v879 = vpop.f32.mrb[0].mxu0
        %v880 = vpop.f32.mrb[0].mxu0
        %v881 = vadd.f32 0.0, %v880
        %v882 = vpop.f32.mrb[0].mxu0
        %883 = vmatprep.mubr.bf16.mxu0 0
        %884 = vmatmul.mubr.bf16.gmra.mrb[0].mxu0 %v809
        %v885 = vpop.f32.mrb[0].mxu0
        %v886 = vadd.f32 0.0, %v885
        %v887 = vpop.f32.mrb[0].mxu0
        %v888 = vpop.f32.mrb[0].mxu0
        %v889 = vadd.f32 0.0, %v888
        %v890 = vpop.f32.mrb[0].mxu0
        %891 = vmatprep.mubr.bf16.mxu0 0
        %892 = vmatmul.mubr.bf16.gmra.mrb[0].mxu0 %v812
        %v893 = vpop.f32.mrb[0].mxu0
        %v894 = vadd.f32 0.0, %v893
        %v895 = vpop.f32.mrb[0].mxu0
        %v896 = vpop.f32.mrb[0].mxu0
        %v897 = vadd.f32 0.0, %v896
        %v898 = vpop.f32.mrb[0].mxu0
        %899 = vmatprep.mubr.bf16.mxu0 0
        %900 = vmatmul.mubr.bf16.gmra.mrb[0].mxu0 %v815
        %v901 = vpop.f32.mrb[0].mxu0
        %v902 = vadd.f32 0.0, %v901
        %v903 = vpop.f32.mrb[0].mxu0
        %v904 = vpop.f32.mrb[0].mxu0
        %v905 = vadd.f32 0.0, %v904
        %v906 = vpop.f32.mrb[0].mxu0
        %907 = vmatprep.mubr.bf16.mxu0 0
        %908 = vmatmul.mubr.bf16.gmra.mrb[0].mxu0 %v818
        %v909 = vpop.f32.mrb[0].mxu0
        %v910 = vadd.f32 0.0, %v909
        %v911 = vpop.f32.mrb[0].mxu0
        %v912 = vpop.f32.mrb[0].mxu0
        %v913 = vadd.f32 0.0, %v912
        %v914 = vpop.f32.mrb[0].mxu0
        %915 = vmatprep.mubr.bf16.mxu0 0
        %916 = vmatmul.mubr.bf16.gmra.mrb[0].mxu0 %v821
        %v917 = vpop.f32.mrb[0].mxu0
        %v918 = vadd.f32 0.0, %v917
        %v919 = vpop.f32.mrb[0].mxu0
        %v920 = vpop.f32.mrb[0].mxu0
        %v921 = vadd.f32 0.0, %v920
        %v922 = vpop.f32.mrb[0].mxu0
        %923 = vmatprep.mubr.bf16.mxu0 0
        %924 = vmatmul.mubr.bf16.gmra.mrb[0].mxu0 %v824
        %v925 = vpop.f32.mrb[0].mxu0
        %v926 = vadd.f32 0.0, %v925
        %v927 = vpop.f32.mrb[0].mxu0
        %v928 = vpop.f32.mrb[0].mxu0
        %v929 = vadd.f32 0.0, %v928
        %v930 = vpop.f32.mrb[0].mxu0
        %931 = vmatprep.mubr.bf16.mxu0 0
        %932 = vmatmul.mubr.bf16.gmra.mrb[0].mxu0 %v827
        %v933 = vpop.f32.mrb[0].mxu0
        %v934 = vadd.f32 0.0, %v933
        %v935 = vpop.f32.mrb[0].mxu0
        %v936 = vpop.f32.mrb[0].mxu0
        %v937 = vadd.f32 0.0, %v936
        %v938 = vpop.f32.mrb[0].mxu0
        %939 = vmatprep.mubr.bf16.mxu0 0
        %940 = vmatmul.mubr.bf16.gmra.mrb[0].mxu0 %v830
        %v941 = vpop.f32.mrb[0].mxu0
        %v942 = vadd.f32 0.0, %v941
        %v943 = vpop.f32.mrb[0].mxu0
        %v944 = vpop.f32.mrb[0].mxu0
        %v945 = vadd.f32 0.0, %v944
        %v946 = vpop.f32.mrb[0].mxu0
        %947 = vmatprep.mubr.bf16.mxu0 0
        %948 = vmatmul.mubr.bf16.gmra.mrb[0].mxu0 %v833
        %v949 = vpop.f32.mrb[0].mxu0
        %v950 = vadd.f32 0.0, %v949
        %v951 = vpop.f32.mrb[0].mxu0
        %v952 = vpop.f32.mrb[0].mxu0
        %v953 = vpop.f32.mrb[0].mxu0
        %954 = vdwg.mxu0
        %v955 = vadd.f32 %v658, %v870
        %v956 = vadd.f32 %v661, %v873
        %v957 = vadd.f32 %v666, %v878
        %v958 = vadd.f32 %v669, %v881
        %v959 = vadd.f32 %v674, %v886
        %v960 = vadd.f32 %v677, %v889
        %v961 = vadd.f32 %v682, %v894
        %v962 = vadd.f32 %v685, %v897
        %v963 = vadd.f32 %v690, %v902
        %v964 = vadd.f32 %v693, %v905
        %v965 = vadd.f32 %v698, %v910
        %v966 = vadd.f32 %v701, %v913
        %v967 = vadd.f32 %v706, %v918
        %v968 = vadd.f32 %v709, %v921
        %v969 = vadd.f32 %v714, %v926
        %v970 = vadd.f32 %v717, %v929
        %v971 = vadd.f32 %v722, %v934
        %v972 = vadd.f32 %v725, %v937
        %v973 = vadd.f32 %v730, %v942
        %v974 = vadd.f32 %v733, %v945
        %v975 = vadd.f32 %v738, %v950
        %v976 = vld [vmem:[%s206 + $0x4] sm:$0x8]
        %v977 = vld [vmem:[%s206 + $0x8] sm:$0xf]
        %v978 = vld [vmem:[%s206 + $0xc] sm:$0xf]
        %v979 = vld [vmem:[%s206 + $0x10] sm:$0xf]
        %v980 = vld [vmem:[%s206 + $0x14] sm:$0xf]
        %v981 = vld [vmem:[%s206 + $0x18] sm:$0xf]
        %v982 = vld [vmem:[%s206 + $0x1c] sm:$0xf]
        %v983 = vld [vmem:[%s206 + $0x20] sm:$0xf]
        %v984 = vld [vmem:[%s206 + $0x24] sm:$0xf]
        %v985 = vld [vmem:[%s206 + $0x28] sm:$0xf]
        %v986 = vld [vmem:[%s206 + $0x2c] sm:$0xf]
        %v987 = vld [vmem:[%s206 + $0x30] sm:$0xf]
        %v988 = vld [vmem:[%s206 + $0x34] sm:$0xf]
        %v989 = vld [vmem:[%s206 + $0x38] sm:$0xf]
        %v990 = vld [vmem:[%s206 + $0x3c] sm:$0xf]
        %v991 = vld [vmem:[%s206 + $0x40] sm:$0xf]
        %v992 = vld [vmem:[%s206 + $0x44] sm:$0xf]
        %v993 = vld [vmem:[%s206 + $0x48] sm:$0xf]
        %v994 = vld [vmem:[%s206 + $0x4c] sm:$0xf]
        %v995 = vld [vmem:[%s206 + $0x50] sm:$0xf]
        %v996 = vld [vmem:[%s206 + $0x54] sm:$0xf]
        %v997 = vld [vmem:[%s206 + $0x58] sm:$0x7]
        %s998 = scalar_lea.vmem %s210, 96
        %v999 = vld [vmem:[%s998] sm:$0xf]
        %v1000 = vld [vmem:[%s998 + $0x4] sm:$0xf]
        %v1001 = vld [vmem:[%s998 + $0x8] sm:$0xf]
        %v1002 = vld [vmem:[%s998 + $0xc] sm:$0xf]
        %v1003 = vld [vmem:[%s998 + $0x10] sm:$0xf]
        %v1004 = vld [vmem:[%s998 + $0x14] sm:$0xf]
        %v1005 = vld [vmem:[%s998 + $0x18] sm:$0xf]
        %v1006 = vld [vmem:[%s998 + $0x1c] sm:$0xf]
        %v1029 = vunpack.c.l.b16 %v976
        %v1030 = vunpack.c.l.b16 %v977
        %v1031 = vunpack.c.l.b16 %v978
        %v1032 = vunpack.c.l.b16 %v979
        %v1033 = vunpack.c.l.b16 %v980
        %v1034 = vunpack.c.l.b16 %v981
        %v1035 = vunpack.c.l.b16 %v982
        %v1036 = vunpack.c.l.b16 %v983
        %v1037 = vunpack.c.l.b16 %v984
        %v1038 = vunpack.c.l.b16 %v985
        %v1039 = vunpack.c.l.b16 %v986
        %v1040 = vunpack.c.l.b16 %v987
        %v1041 = vunpack.c.l.b16 %v988
        %v1042 = vunpack.c.l.b16 %v989
        %v1043 = vunpack.c.l.b16 %v990
        %v1044 = vunpack.c.l.b16 %v991
        %v1045 = vunpack.c.l.b16 %v992
        %v1046 = vunpack.c.l.b16 %v993
        %v1047 = vunpack.c.l.b16 %v994
        %v1048 = vunpack.c.l.b16 %v995
        %v1049 = vunpack.c.l.b16 %v996
        %v1050 = vunpack.c.l.b16 %v997
        %v1051 = vpack.c.b16 %v1030, %v1029
        %v1052 = vpack.c.b16 %v1032, %v1031
        %v1053 = vpack.c.b16 %v1034, %v1033
        %v1054 = vpack.c.b16 %v1036, %v1035
        %v1055 = vpack.c.b16 %v1038, %v1037
        %v1056 = vpack.c.b16 %v1040, %v1039
        %v1057 = vpack.c.b16 %v1042, %v1041
        %v1058 = vpack.c.b16 %v1044, %v1043
        %v1059 = vpack.c.b16 %v1046, %v1045
        %v1060 = vpack.c.b16 %v1048, %v1047
        %v1061 = vpack.c.b16 %v1050, %v1049
        %vm1062 = vcmask 1044480
        %v1063 = vrot.slane %v1051, 3
        %v1064 = vrot.slane %v1052, 3
        %v1065 = vsel %vm1062, %v1063, %v1064
        %v1066 = vrot.slane %v1053, 3
        %v1067 = vsel %vm1062, %v1064, %v1066
        %v1068 = vrot.slane %v1054, 3
        %v1069 = vsel %vm1062, %v1066, %v1068
        %v1070 = vrot.slane %v1055, 3
        %v1071 = vsel %vm1062, %v1068, %v1070
        %v1072 = vrot.slane %v1056, 3
        %v1073 = vsel %vm1062, %v1070, %v1072
        %v1074 = vrot.slane %v1057, 3
        %v1075 = vsel %vm1062, %v1072, %v1074
        %v1076 = vrot.slane %v1058, 3
        %v1077 = vsel %vm1062, %v1074, %v1076
        %v1078 = vrot.slane %v1059, 3
        %v1079 = vsel %vm1062, %v1076, %v1078
        %v1080 = vrot.slane %v1060, 3
        %v1081 = vsel %vm1062, %v1078, %v1080
        %v1082 = vrot.slane %v1061, 3
        %v1083 = vsel %vm1062, %v1080, %v1082
        %v1092 = vunpack.c.l.b16 %v999
        %v1093 = vunpack.c.l.b16 %v1000
        %v1094 = vunpack.c.l.b16 %v1001
        %v1095 = vunpack.c.l.b16 %v1002
        %v1096 = vunpack.c.l.b16 %v1003
        %v1097 = vunpack.c.l.b16 %v1004
        %v1098 = vunpack.c.l.b16 %v1005
        %v1099 = vunpack.c.l.b16 %v1006
        %v1100 = vpack.c.b16 %v1093, %v1092
        %v1101 = vpack.c.b16 %v1095, %v1094
        %v1102 = vpack.c.b16 %v1097, %v1096
        %v1103 = vpack.c.b16 %v1099, %v1098
        %v1109 = vsel %vm421, %v1065, 0
        %v1112 = vsel %vm421, %v1067, 0
        %v1115 = vsel %vm421, %v1069, 0
        %v1118 = vsel %vm421, %v1071, 0
        %v1121 = vsel %vm421, %v1073, 0
        %v1124 = vsel %vm421, %v1075, 0
        %v1127 = vsel %vm421, %v1077, 0
        %v1130 = vsel %vm421, %v1079, 0
        %v1133 = vsel %vm421, %v1081, 0
        %v1136 = vsel %vm421, %v1083, 0
        %v1139 = vsel %vm421, %v1082, 0
        %1141 = vmatprep.subr.bf16.mxu0 0
        %1142 = vmatpush1.bf16.msra.mxu0 %v1100
        %1143 = vmatprep.subr.bf16.mxu0 0
        %1144 = vmatpush1.bf16.msra.mxu0 %v1101
        %1145 = vmatprep.subr.bf16.mxu0 0
        %1146 = vmatpush1.bf16.msra.mxu0 %v1102
        %1147 = vmatprep.subr.bf16.mxu0 0
        %1148 = vmatpush1.bf16.msra.mxu0 %v1103
        %1149 = vmatprep.subr.bf16.mxu0 0
        %1150 = vmatpush1.bf16.msra.mxu0 0
        %1151 = vmatprep.subr.bf16.mxu0 0
        %1152 = vmatpush1.bf16.msra.mxu0 0
        %1153 = vmatprep.subr.bf16.mxu0 0
        %1154 = vmatpush1.bf16.msra.mxu0 0
        %1155 = vmatprep.subr.bf16.mxu0 0
        %1156 = vmatpush1.bf16.msra.mxu0 0
        %1157 = vmatprep.subr.bf16.mxu0 0
        %1158 = vmatpush1.bf16.msra.mxu0 0
        %1159 = vmatprep.subr.bf16.mxu0 0
        %1160 = vmatpush1.bf16.msra.mxu0 0
        %1161 = vmatprep.subr.bf16.mxu0 0
        %1162 = vmatpush1.bf16.msra.mxu0 0
        %1163 = vmatprep.subr.bf16.mxu0 0
        %1164 = vmatpush1.bf16.msra.mxu0 0
        %1165 = vmatprep.subr.bf16.mxu0 0
        %1166 = vmatpush1.bf16.msra.mxu0 0
        %1167 = vmatprep.subr.bf16.mxu0 0
        %1168 = vmatpush1.bf16.msra.mxu0 0
        %1169 = vmatprep.subr.bf16.mxu0 0
        %1170 = vmatpush1.bf16.msra.mxu0 0
        %1171 = vmatprep.subr.bf16.mxu0 0
        %1172 = vmatpush1.bf16.msra.mxu0 0
        %1173 = vmatprep.mubr.bf16.mxu0 0
        %1174 = vmatmul.mubr.bf16.gmra.mrb[0].mxu0 %v1109
        %v1175 = vpop.f32.mrb[0].mxu0
        %v1176 = vadd.f32 0.0, %v1175
        %v1177 = vpop.f32.mrb[0].mxu0
        %v1178 = vpop.f32.mrb[0].mxu0
        %v1179 = vadd.f32 0.0, %v1178
        %v1180 = vpop.f32.mrb[0].mxu0
        %1181 = vmatprep.mubr.bf16.mxu0 0
        %1182 = vmatmul.mubr.bf16.gmra.mrb[0].mxu0 %v1112
        %v1183 = vpop.f32.mrb[0].mxu0
        %v1184 = vadd.f32 0.0, %v1183
        %v1185 = vpop.f32.mrb[0].mxu0
        %v1186 = vpop.f32.mrb[0].mxu0
        %v1187 = vadd.f32 0.0, %v1186
        %v1188 = vpop.f32.mrb[0].mxu0
        %1189 = vmatprep.mubr.bf16.mxu0 0
        %1190 = vmatmul.mubr.bf16.gmra.mrb[0].mxu0 %v1115
        %v1191 = vpop.f32.mrb[0].mxu0
        %v1192 = vadd.f32 0.0, %v1191
        %v1193 = vpop.f32.mrb[0].mxu0
        %v1194 = vpop.f32.mrb[0].mxu0
        %v1195 = vadd.f32 0.0, %v1194
        %v1196 = vpop.f32.mrb[0].mxu0
        %1197 = vmatprep.mubr.bf16.mxu0 0
        %1198 = vmatmul.mubr.bf16.gmra.mrb[0].mxu0 %v1118
        %v1199 = vpop.f32.mrb[0].mxu0
        %v1200 = vadd.f32 0.0, %v1199
        %v1201 = vpop.f32.mrb[0].mxu0
        %v1202 = vpop.f32.mrb[0].mxu0
        %v1203 = vadd.f32 0.0, %v1202
        %v1204 = vpop.f32.mrb[0].mxu0
        %1205 = vmatprep.mubr.bf16.mxu0 0
        %1206 = vmatmul.mubr.bf16.gmra.mrb[0].mxu0 %v1121
        %v1207 = vpop.f32.mrb[0].mxu0
        %v1208 = vadd.f32 0.0, %v1207
        %v1209 = vpop.f32.mrb[0].mxu0
        %v1210 = vpop.f32.mrb[0].mxu0
        %v1211 = vadd.f32 0.0, %v1210
        %v1212 = vpop.f32.mrb[0].mxu0
        %1213 = vmatprep.mubr.bf16.mxu0 0
        %1214 = vmatmul.mubr.bf16.gmra.mrb[0].mxu0 %v1124
        %v1215 = vpop.f32.mrb[0].mxu0
        %v1216 = vadd.f32 0.0, %v1215
        %v1217 = vpop.f32.mrb[0].mxu0
        %v1218 = vpop.f32.mrb[0].mxu0
        %v1219 = vadd.f32 0.0, %v1218
        %v1220 = vpop.f32.mrb[0].mxu0
        %1221 = vmatprep.mubr.bf16.mxu0 0
        %1222 = vmatmul.mubr.bf16.gmra.mrb[0].mxu0 %v1127
        %v1223 = vpop.f32.mrb[0].mxu0
        %v1224 = vadd.f32 0.0, %v1223
        %v1225 = vpop.f32.mrb[0].mxu0
        %v1226 = vpop.f32.mrb[0].mxu0
        %v1227 = vadd.f32 0.0, %v1226
        %v1228 = vpop.f32.mrb[0].mxu0
        %1229 = vmatprep.mubr.bf16.mxu0 0
        %1230 = vmatmul.mubr.bf16.gmra.mrb[0].mxu0 %v1130
        %v1231 = vpop.f32.mrb[0].mxu0
        %v1232 = vadd.f32 0.0, %v1231
        %v1233 = vpop.f32.mrb[0].mxu0
        %v1234 = vpop.f32.mrb[0].mxu0
        %v1235 = vadd.f32 0.0, %v1234
        %v1236 = vpop.f32.mrb[0].mxu0
        %1237 = vmatprep.mubr.bf16.mxu0 0
        %1238 = vmatmul.mubr.bf16.gmra.mrb[0].mxu0 %v1133
        %v1239 = vpop.f32.mrb[0].mxu0
        %v1240 = vadd.f32 0.0, %v1239
        %v1241 = vpop.f32.mrb[0].mxu0
        %v1242 = vpop.f32.mrb[0].mxu0
        %v1243 = vadd.f32 0.0, %v1242
        %v1244 = vpop.f32.mrb[0].mxu0
        %1245 = vmatprep.mubr.bf16.mxu0 0
        %1246 = vmatmul.mubr.bf16.gmra.mrb[0].mxu0 %v1136
        %v1247 = vpop.f32.mrb[0].mxu0
        %v1248 = vadd.f32 0.0, %v1247
        %v1249 = vpop.f32.mrb[0].mxu0
        %v1250 = vpop.f32.mrb[0].mxu0
        %v1251 = vadd.f32 0.0, %v1250
        %v1252 = vpop.f32.mrb[0].mxu0
        %1253 = vmatprep.mubr.bf16.mxu0 0
        %1254 = vmatmul.mubr.bf16.gmra.mrb[0].mxu0 %v1139
        %v1255 = vpop.f32.mrb[0].mxu0
        %v1256 = vadd.f32 0.0, %v1255
        %v1257 = vpop.f32.mrb[0].mxu0
        %v1258 = vpop.f32.mrb[0].mxu0
        %v1259 = vpop.f32.mrb[0].mxu0
        %1260 = vdwg.mxu0
        %v1261 = vadd.f32 %v955, %v1176
        %v1262 = vadd.f32 %v956, %v1179
        %v1263 = vadd.f32 %v957, %v1184
        %v1264 = vadd.f32 %v958, %v1187
        %v1265 = vadd.f32 %v959, %v1192
        %v1266 = vadd.f32 %v960, %v1195
        %v1267 = vadd.f32 %v961, %v1200
        %v1268 = vadd.f32 %v962, %v1203
        %v1269 = vadd.f32 %v963, %v1208
        %v1270 = vadd.f32 %v964, %v1211
        %v1271 = vadd.f32 %v965, %v1216
        %v1272 = vadd.f32 %v966, %v1219
        %v1273 = vadd.f32 %v967, %v1224
        %v1274 = vadd.f32 %v968, %v1227
        %v1275 = vadd.f32 %v969, %v1232
        %v1276 = vadd.f32 %v970, %v1235
        %v1277 = vadd.f32 %v971, %v1240
        %v1278 = vadd.f32 %v972, %v1243
        %v1279 = vadd.f32 %v973, %v1248
        %v1280 = vadd.f32 %v974, %v1251
        %v1281 = vadd.f32 %v975, %v1256
        %v1282 = vld [vmem:[%s206 + $0x58] sm:$0xf]
        %s1283 = scalar_lea.vmem %s210, 128
        %v1284 = vld [vmem:[%s1283] sm:$0xf]
        %v1285 = vld [vmem:[%s1283 + $0x4] sm:$0xf]
        %v1286 = vld [vmem:[%s1283 + $0x8] sm:$0xf]
        %v1287 = vld [vmem:[%s1283 + $0xc] sm:$0xf]
        %v1288 = vld [vmem:[%s1283 + $0x10] sm:$0xf]
        %v1289 = vld [vmem:[%s1283 + $0x14] sm:$0xf]
        %v1290 = vld [vmem:[%s1283 + $0x18] sm:$0xf]
        %v1291 = vld [vmem:[%s1283 + $0x1c] sm:$0xf]
        %v1293 = vunpack.c.l.b16 %v1282
        %v1294 = vpack.c.b16 %v1293, %v1049
        %vm1295 = vsmask.f32 4352
        %v1297 = vshrl.u32 %v1051, 16
        %v1299 = vrot.slane %v1297, 3
        %v1300 = vshll.u32 %v1051, 16
        %v1302 = vrot.slane %v1300, 4
        %v1303 = vor.u32 %v1299, %v1302
        %v1305 = vshrl.u32 %v1052, 16
        %v1307 = vrot.slane %v1305, 3
        %v1308 = vshll.u32 %v1052, 16
        %v1310 = vrot.slane %v1308, 4
        %v1311 = vor.u32 %v1307, %v1310
        %v1312 = vsel %vm1295, %v1303, %v1311
        %v1314 = vshrl.u32 %v1053, 16
        %v1316 = vrot.slane %v1314, 3
        %v1317 = vshll.u32 %v1053, 16
        %v1319 = vrot.slane %v1317, 4
        %v1320 = vor.u32 %v1316, %v1319
        %v1321 = vsel %vm1295, %v1311, %v1320
        %v1323 = vshrl.u32 %v1054, 16
        %v1325 = vrot.slane %v1323, 3
        %v1326 = vshll.u32 %v1054, 16
        %v1328 = vrot.slane %v1326, 4
        %v1329 = vor.u32 %v1325, %v1328
        %v1330 = vsel %vm1295, %v1320, %v1329
        %v1332 = vshrl.u32 %v1055, 16
        %v1334 = vrot.slane %v1332, 3
        %v1335 = vshll.u32 %v1055, 16
        %v1337 = vrot.slane %v1335, 4
        %v1338 = vor.u32 %v1334, %v1337
        %v1339 = vsel %vm1295, %v1329, %v1338
        %v1341 = vshrl.u32 %v1056, 16
        %v1343 = vrot.slane %v1341, 3
        %v1344 = vshll.u32 %v1056, 16
        %v1346 = vrot.slane %v1344, 4
        %v1347 = vor.u32 %v1343, %v1346
        %v1348 = vsel %vm1295, %v1338, %v1347
        %v1350 = vshrl.u32 %v1057, 16
        %v1352 = vrot.slane %v1350, 3
        %v1353 = vshll.u32 %v1057, 16
        %v1355 = vrot.slane %v1353, 4
        %v1356 = vor.u32 %v1352, %v1355
        %v1357 = vsel %vm1295, %v1347, %v1356
        %v1359 = vshrl.u32 %v1058, 16
        %v1361 = vrot.slane %v1359, 3
        %v1362 = vshll.u32 %v1058, 16
        %v1364 = vrot.slane %v1362, 4
        %v1365 = vor.u32 %v1361, %v1364
        %v1366 = vsel %vm1295, %v1356, %v1365
        %v1368 = vshrl.u32 %v1059, 16
        %v1370 = vrot.slane %v1368, 3
        %v1371 = vshll.u32 %v1059, 16
        %v1373 = vrot.slane %v1371, 4
        %v1374 = vor.u32 %v1370, %v1373
        %v1375 = vsel %vm1295, %v1365, %v1374
        %v1377 = vshrl.u32 %v1060, 16
        %v1379 = vrot.slane %v1377, 3
        %v1380 = vshll.u32 %v1060, 16
        %v1382 = vrot.slane %v1380, 4
        %v1383 = vor.u32 %v1379, %v1382
        %v1384 = vsel %vm1295, %v1374, %v1383
        %v1386 = vshrl.u32 %v1294, 16
        %v1388 = vrot.slane %v1386, 3
        %v1389 = vshll.u32 %v1294, 16
        %v1391 = vrot.slane %v1389, 4
        %v1392 = vor.u32 %v1388, %v1391
        %v1393 = vsel %vm1295, %v1383, %v1392
        %v1402 = vunpack.c.l.b16 %v1284
        %v1403 = vunpack.c.l.b16 %v1285
        %v1404 = vunpack.c.l.b16 %v1286
        %v1405 = vunpack.c.l.b16 %v1287
        %v1406 = vunpack.c.l.b16 %v1288
        %v1407 = vunpack.c.l.b16 %v1289
        %v1408 = vunpack.c.l.b16 %v1290
        %v1409 = vunpack.c.l.b16 %v1291
        %v1410 = vpack.c.b16 %v1403, %v1402
        %v1411 = vpack.c.b16 %v1405, %v1404
        %v1412 = vpack.c.b16 %v1407, %v1406
        %v1413 = vpack.c.b16 %v1409, %v1408
        %v1419 = vsel %vm421, %v1312, 0
        %v1422 = vsel %vm421, %v1321, 0
        %v1425 = vsel %vm421, %v1330, 0
        %v1428 = vsel %vm421, %v1339, 0
        %v1431 = vsel %vm421, %v1348, 0
        %v1434 = vsel %vm421, %v1357, 0
        %v1437 = vsel %vm421, %v1366, 0
        %v1440 = vsel %vm421, %v1375, 0
        %v1443 = vsel %vm421, %v1384, 0
        %v1446 = vsel %vm421, %v1393, 0
        %v1449 = vsel %vm421, %v1392, 0
        %1451 = vmatprep.subr.bf16.mxu0 0
        %1452 = vmatpush1.bf16.msra.mxu0 %v1410
        %1453 = vmatprep.subr.bf16.mxu0 0
        %1454 = vmatpush1.bf16.msra.mxu0 %v1411
        %1455 = vmatprep.subr.bf16.mxu0 0
        %1456 = vmatpush1.bf16.msra.mxu0 %v1412
        %1457 = vmatprep.subr.bf16.mxu0 0
        %1458 = vmatpush1.bf16.msra.mxu0 %v1413
        %1459 = vmatprep.subr.bf16.mxu0 0
        %1460 = vmatpush1.bf16.msra.mxu0 0
        %1461 = vmatprep.subr.bf16.mxu0 0
        %1462 = vmatpush1.bf16.msra.mxu0 0
        %1463 = vmatprep.subr.bf16.mxu0 0
        %1464 = vmatpush1.bf16.msra.mxu0 0
        %1465 = vmatprep.subr.bf16.mxu0 0
        %1466 = vmatpush1.bf16.msra.mxu0 0
        %1467 = vmatprep.subr.bf16.mxu0 0
        %1468 = vmatpush1.bf16.msra.mxu0 0
        %1469 = vmatprep.subr.bf16.mxu0 0
        %1470 = vmatpush1.bf16.msra.mxu0 0
        %1471 = vmatprep.subr.bf16.mxu0 0
        %1472 = vmatpush1.bf16.msra.mxu0 0
        %1473 = vmatprep.subr.bf16.mxu0 0
        %1474 = vmatpush1.bf16.msra.mxu0 0
        %1475 = vmatprep.subr.bf16.mxu0 0
        %1476 = vmatpush1.bf16.msra.mxu0 0
        %1477 = vmatprep.subr.bf16.mxu0 0
        %1478 = vmatpush1.bf16.msra.mxu0 0
        %1479 = vmatprep.subr.bf16.mxu0 0
        %1480 = vmatpush1.bf16.msra.mxu0 0
        %1481 = vmatprep.subr.bf16.mxu0 0
        %1482 = vmatpush1.bf16.msra.mxu0 0
        %1483 = vmatprep.mubr.bf16.mxu0 0
        %1484 = vmatmul.mubr.bf16.gmra.mrb[0].mxu0 %v1419
        %v1485 = vpop.f32.mrb[0].mxu0
        %v1486 = vadd.f32 0.0, %v1485
        %v1487 = vpop.f32.mrb[0].mxu0
        %v1488 = vpop.f32.mrb[0].mxu0
        %v1489 = vadd.f32 0.0, %v1488
        %v1490 = vpop.f32.mrb[0].mxu0
        %1491 = vmatprep.mubr.bf16.mxu0 0
        %1492 = vmatmul.mubr.bf16.gmra.mrb[0].mxu0 %v1422
        %v1493 = vpop.f32.mrb[0].mxu0
        %v1494 = vadd.f32 0.0, %v1493
        %v1495 = vpop.f32.mrb[0].mxu0
        %v1496 = vpop.f32.mrb[0].mxu0
        %v1497 = vadd.f32 0.0, %v1496
        %v1498 = vpop.f32.mrb[0].mxu0
        %1499 = vmatprep.mubr.bf16.mxu0 0
        %1500 = vmatmul.mubr.bf16.gmra.mrb[0].mxu0 %v1425
        %v1501 = vpop.f32.mrb[0].mxu0
        %v1502 = vadd.f32 0.0, %v1501
        %v1503 = vpop.f32.mrb[0].mxu0
        %v1504 = vpop.f32.mrb[0].mxu0
        %v1505 = vadd.f32 0.0, %v1504
        %v1506 = vpop.f32.mrb[0].mxu0
        %1507 = vmatprep.mubr.bf16.mxu0 0
        %1508 = vmatmul.mubr.bf16.gmra.mrb[0].mxu0 %v1428
        %v1509 = vpop.f32.mrb[0].mxu0
        %v1510 = vadd.f32 0.0, %v1509
        %v1511 = vpop.f32.mrb[0].mxu0
        %v1512 = vpop.f32.mrb[0].mxu0
        %v1513 = vadd.f32 0.0, %v1512
        %v1514 = vpop.f32.mrb[0].mxu0
        %1515 = vmatprep.mubr.bf16.mxu0 0
        %1516 = vmatmul.mubr.bf16.gmra.mrb[0].mxu0 %v1431
        %v1517 = vpop.f32.mrb[0].mxu0
        %v1518 = vadd.f32 0.0, %v1517
        %v1519 = vpop.f32.mrb[0].mxu0
        %v1520 = vpop.f32.mrb[0].mxu0
        %v1521 = vadd.f32 0.0, %v1520
        %v1522 = vpop.f32.mrb[0].mxu0
        %1523 = vmatprep.mubr.bf16.mxu0 0
        %1524 = vmatmul.mubr.bf16.gmra.mrb[0].mxu0 %v1434
        %v1525 = vpop.f32.mrb[0].mxu0
        %v1526 = vadd.f32 0.0, %v1525
        %v1527 = vpop.f32.mrb[0].mxu0
        %v1528 = vpop.f32.mrb[0].mxu0
        %v1529 = vadd.f32 0.0, %v1528
        %v1530 = vpop.f32.mrb[0].mxu0
        %1531 = vmatprep.mubr.bf16.mxu0 0
        %1532 = vmatmul.mubr.bf16.gmra.mrb[0].mxu0 %v1437
        %v1533 = vpop.f32.mrb[0].mxu0
        %v1534 = vadd.f32 0.0, %v1533
        %v1535 = vpop.f32.mrb[0].mxu0
        %v1536 = vpop.f32.mrb[0].mxu0
        %v1537 = vadd.f32 0.0, %v1536
        %v1538 = vpop.f32.mrb[0].mxu0
        %1539 = vmatprep.mubr.bf16.mxu0 0
        %1540 = vmatmul.mubr.bf16.gmra.mrb[0].mxu0 %v1440
        %v1541 = vpop.f32.mrb[0].mxu0
        %v1542 = vadd.f32 0.0, %v1541
        %v1543 = vpop.f32.mrb[0].mxu0
        %v1544 = vpop.f32.mrb[0].mxu0
        %v1545 = vadd.f32 0.0, %v1544
        %v1546 = vpop.f32.mrb[0].mxu0
        %1547 = vmatprep.mubr.bf16.mxu0 0
        %1548 = vmatmul.mubr.bf16.gmra.mrb[0].mxu0 %v1443
        %v1549 = vpop.f32.mrb[0].mxu0
        %v1550 = vadd.f32 0.0, %v1549
        %v1551 = vpop.f32.mrb[0].mxu0
        %v1552 = vpop.f32.mrb[0].mxu0
        %v1553 = vadd.f32 0.0, %v1552
        %v1554 = vpop.f32.mrb[0].mxu0
        %1555 = vmatprep.mubr.bf16.mxu0 0
        %1556 = vmatmul.mubr.bf16.gmra.mrb[0].mxu0 %v1446
        %v1557 = vpop.f32.mrb[0].mxu0
        %v1558 = vadd.f32 0.0, %v1557
        %v1559 = vpop.f32.mrb[0].mxu0
        %v1560 = vpop.f32.mrb[0].mxu0
        %v1561 = vadd.f32 0.0, %v1560
        %v1562 = vpop.f32.mrb[0].mxu0
        %1563 = vmatprep.mubr.bf16.mxu0 0
        %1564 = vmatmul.mubr.bf16.gmra.mrb[0].mxu0 %v1449
        %v1565 = vpop.f32.mrb[0].mxu0
        %v1566 = vadd.f32 0.0, %v1565
        %v1567 = vpop.f32.mrb[0].mxu0
        %v1568 = vpop.f32.mrb[0].mxu0
        %v1569 = vpop.f32.mrb[0].mxu0
        %1570 = vdwg.mxu0
        %v1571 = vadd.f32 %v1261, %v1486
        %v1572 = vadd.f32 %v1262, %v1489
        %v1573 = vadd.f32 %v1263, %v1494
        %v1574 = vadd.f32 %v1264, %v1497
        %v1575 = vadd.f32 %v1265, %v1502
        %v1576 = vadd.f32 %v1266, %v1505
        %v1577 = vadd.f32 %v1267, %v1510
        %v1578 = vadd.f32 %v1268, %v1513
        %v1579 = vadd.f32 %v1269, %v1518
        %v1580 = vadd.f32 %v1270, %v1521
        %v1581 = vadd.f32 %v1271, %v1526
        %v1582 = vadd.f32 %v1272, %v1529
        %v1583 = vadd.f32 %v1273, %v1534
        %v1584 = vadd.f32 %v1274, %v1537
        %v1585 = vadd.f32 %v1275, %v1542
        %v1586 = vadd.f32 %v1276, %v1545
        %v1587 = vadd.f32 %v1277, %v1550
        %v1588 = vadd.f32 %v1278, %v1553
        %v1589 = vadd.f32 %v1279, %v1558
        %v1590 = vadd.f32 %v1280, %v1561
        %v1591 = vadd.f32 %v1281, %v1566
        %s1592 = scalar_lea.vmem %s210, 160
        %v1593 = vld [vmem:[%s1592] sm:$0xf]
        %v1594 = vld [vmem:[%s1592 + $0x4] sm:$0xf]
        %v1595 = vld [vmem:[%s1592 + $0x8] sm:$0xf]
        %v1596 = vld [vmem:[%s1592 + $0xc] sm:$0xf]
        %v1597 = vld [vmem:[%s1592 + $0x10] sm:$0xf]
        %v1598 = vld [vmem:[%s1592 + $0x14] sm:$0xf]
        %v1599 = vld [vmem:[%s1592 + $0x18] sm:$0xf]
        %v1600 = vld [vmem:[%s1592 + $0x1c] sm:$0xf]
        %v1601 = vpack.c.b16 %v1031, %v1030
        %v1602 = vpack.c.b16 %v1033, %v1032
        %v1603 = vpack.c.b16 %v1035, %v1034
        %v1604 = vpack.c.b16 %v1037, %v1036
        %v1605 = vpack.c.b16 %v1039, %v1038
        %v1606 = vpack.c.b16 %v1041, %v1040
        %v1607 = vpack.c.b16 %v1043, %v1042
        %v1608 = vpack.c.b16 %v1045, %v1044
        %v1609 = vpack.c.b16 %v1047, %v1046
        %v1610 = vpack.c.b16 %v1049, %v1048
        %v1611 = vpack.c.b16 %v1293, %v1293
        %v1620 = vunpack.c.l.b16 %v1593
        %v1621 = vunpack.c.l.b16 %v1594
        %v1622 = vunpack.c.l.b16 %v1595
        %v1623 = vunpack.c.l.b16 %v1596
        %v1624 = vunpack.c.l.b16 %v1597
        %v1625 = vunpack.c.l.b16 %v1598
        %v1626 = vunpack.c.l.b16 %v1599
        %v1627 = vunpack.c.l.b16 %v1600
        %v1628 = vpack.c.b16 %v1621, %v1620
        %v1629 = vpack.c.b16 %v1623, %v1622
        %v1630 = vpack.c.b16 %v1625, %v1624
        %v1631 = vpack.c.b16 %v1627, %v1626
        %v1637 = vsel %vm421, %v1601, 0
        %v1640 = vsel %vm421, %v1602, 0
        %v1643 = vsel %vm421, %v1603, 0
        %v1646 = vsel %vm421, %v1604, 0
        %v1649 = vsel %vm421, %v1605, 0
        %v1652 = vsel %vm421, %v1606, 0
        %v1655 = vsel %vm421, %v1607, 0
        %v1658 = vsel %vm421, %v1608, 0
        %v1661 = vsel %vm421, %v1609, 0
        %v1664 = vsel %vm421, %v1610, 0
        %v1667 = vsel %vm421, %v1611, 0
        %1669 = vmatprep.subr.bf16.mxu0 0
        %1670 = vmatpush1.bf16.msra.mxu0 %v1628
        %1671 = vmatprep.subr.bf16.mxu0 0
        %1672 = vmatpush1.bf16.msra.mxu0 %v1629
        %1673 = vmatprep.subr.bf16.mxu0 0
        %1674 = vmatpush1.bf16.msra.mxu0 %v1630
        %1675 = vmatprep.subr.bf16.mxu0 0
        %1676 = vmatpush1.bf16.msra.mxu0 %v1631
        %1677 = vmatprep.subr.bf16.mxu0 0
        %1678 = vmatpush1.bf16.msra.mxu0 0
        %1679 = vmatprep.subr.bf16.mxu0 0
        %1680 = vmatpush1.bf16.msra.mxu0 0
        %1681 = vmatprep.subr.bf16.mxu0 0
        %1682 = vmatpush1.bf16.msra.mxu0 0
        %1683 = vmatprep.subr.bf16.mxu0 0
        %1684 = vmatpush1.bf16.msra.mxu0 0
        %1685 = vmatprep.subr.bf16.mxu0 0
        %1686 = vmatpush1.bf16.msra.mxu0 0
        %1687 = vmatprep.subr.bf16.mxu0 0
        %1688 = vmatpush1.bf16.msra.mxu0 0
        %1689 = vmatprep.subr.bf16.mxu0 0
        %1690 = vmatpush1.bf16.msra.mxu0 0
        %1691 = vmatprep.subr.bf16.mxu0 0
        %1692 = vmatpush1.bf16.msra.mxu0 0
        %1693 = vmatprep.subr.bf16.mxu0 0
        %1694 = vmatpush1.bf16.msra.mxu0 0
        %1695 = vmatprep.subr.bf16.mxu0 0
        %1696 = vmatpush1.bf16.msra.mxu0 0
        %1697 = vmatprep.subr.bf16.mxu0 0
        %1698 = vmatpush1.bf16.msra.mxu0 0
        %1699 = vmatprep.subr.bf16.mxu0 0
        %1700 = vmatpush1.bf16.msra.mxu0 0
        %1701 = vmatprep.mubr.bf16.mxu0 0
        %1702 = vmatmul.mubr.bf16.gmra.mrb[0].mxu0 %v1637
        %v1703 = vpop.f32.mrb[0].mxu0
        %v1704 = vadd.f32 0.0, %v1703
        %v1705 = vpop.f32.mrb[0].mxu0
        %v1706 = vpop.f32.mrb[0].mxu0
        %v1707 = vadd.f32 0.0, %v1706
        %v1708 = vpop.f32.mrb[0].mxu0
        %1709 = vmatprep.mubr.bf16.mxu0 0
        %1710 = vmatmul.mubr.bf16.gmra.mrb[0].mxu0 %v1640
        %v1711 = vpop.f32.mrb[0].mxu0
        %v1712 = vadd.f32 0.0, %v1711
        %v1713 = vpop.f32.mrb[0].mxu0
        %v1714 = vpop.f32.mrb[0].mxu0
        %v1715 = vadd.f32 0.0, %v1714
        %v1716 = vpop.f32.mrb[0].mxu0
        %1717 = vmatprep.mubr.bf16.mxu0 0
        %1718 = vmatmul.mubr.bf16.gmra.mrb[0].mxu0 %v1643
        %v1719 = vpop.f32.mrb[0].mxu0
        %v1720 = vadd.f32 0.0, %v1719
        %v1721 = vpop.f32.mrb[0].mxu0
        %v1722 = vpop.f32.mrb[0].mxu0
        %v1723 = vadd.f32 0.0, %v1722
        %v1724 = vpop.f32.mrb[0].mxu0
        %1725 = vmatprep.mubr.bf16.mxu0 0
        %1726 = vmatmul.mubr.bf16.gmra.mrb[0].mxu0 %v1646
        %v1727 = vpop.f32.mrb[0].mxu0
        %v1728 = vadd.f32 0.0, %v1727
        %v1729 = vpop.f32.mrb[0].mxu0
        %v1730 = vpop.f32.mrb[0].mxu0
        %v1731 = vadd.f32 0.0, %v1730
        %v1732 = vpop.f32.mrb[0].mxu0
        %1733 = vmatprep.mubr.bf16.mxu0 0
        %1734 = vmatmul.mubr.bf16.gmra.mrb[0].mxu0 %v1649
        %v1735 = vpop.f32.mrb[0].mxu0
        %v1736 = vadd.f32 0.0, %v1735
        %v1737 = vpop.f32.mrb[0].mxu0
        %v1738 = vpop.f32.mrb[0].mxu0
        %v1739 = vadd.f32 0.0, %v1738
        %v1740 = vpop.f32.mrb[0].mxu0
        %1741 = vmatprep.mubr.bf16.mxu0 0
        %1742 = vmatmul.mubr.bf16.gmra.mrb[0].mxu0 %v1652
        %v1743 = vpop.f32.mrb[0].mxu0
        %v1744 = vadd.f32 0.0, %v1743
        %v1745 = vpop.f32.mrb[0].mxu0
        %v1746 = vpop.f32.mrb[0].mxu0
        %v1747 = vadd.f32 0.0, %v1746
        %v1748 = vpop.f32.mrb[0].mxu0
        %1749 = vmatprep.mubr.bf16.mxu0 0
        %1750 = vmatmul.mubr.bf16.gmra.mrb[0].mxu0 %v1655
        %v1751 = vpop.f32.mrb[0].mxu0
        %v1752 = vadd.f32 0.0, %v1751
        %v1753 = vpop.f32.mrb[0].mxu0
        %v1754 = vpop.f32.mrb[0].mxu0
        %v1755 = vadd.f32 0.0, %v1754
        %v1756 = vpop.f32.mrb[0].mxu0
        %1757 = vmatprep.mubr.bf16.mxu0 0
        %1758 = vmatmul.mubr.bf16.gmra.mrb[0].mxu0 %v1658
        %v1759 = vpop.f32.mrb[0].mxu0
        %v1760 = vadd.f32 0.0, %v1759
        %v1761 = vpop.f32.mrb[0].mxu0
        %v1762 = vpop.f32.mrb[0].mxu0
        %v1763 = vadd.f32 0.0, %v1762
        %v1764 = vpop.f32.mrb[0].mxu0
        %1765 = vmatprep.mubr.bf16.mxu0 0
        %1766 = vmatmul.mubr.bf16.gmra.mrb[0].mxu0 %v1661
        %v1767 = vpop.f32.mrb[0].mxu0
        %v1768 = vadd.f32 0.0, %v1767
        %v1769 = vpop.f32.mrb[0].mxu0
        %v1770 = vpop.f32.mrb[0].mxu0
        %v1771 = vadd.f32 0.0, %v1770
        %v1772 = vpop.f32.mrb[0].mxu0
        %1773 = vmatprep.mubr.bf16.mxu0 0
        %1774 = vmatmul.mubr.bf16.gmra.mrb[0].mxu0 %v1664
        %v1775 = vpop.f32.mrb[0].mxu0
        %v1776 = vadd.f32 0.0, %v1775
        %v1777 = vpop.f32.mrb[0].mxu0
        %v1778 = vpop.f32.mrb[0].mxu0
        %v1779 = vadd.f32 0.0, %v1778
        %v1780 = vpop.f32.mrb[0].mxu0
        %1781 = vmatprep.mubr.bf16.mxu0 0
        %1782 = vmatmul.mubr.bf16.gmra.mrb[0].mxu0 %v1667
        %v1783 = vpop.f32.mrb[0].mxu0
        %v1784 = vadd.f32 0.0, %v1783
        %v1785 = vpop.f32.mrb[0].mxu0
        %v1786 = vpop.f32.mrb[0].mxu0
        %v1787 = vpop.f32.mrb[0].mxu0
        %1788 = vdwg.mxu0
        %v1789 = vadd.f32 %v1571, %v1704
        %v1790 = vadd.f32 %v1572, %v1707
        %v1791 = vadd.f32 %v1573, %v1712
        %v1792 = vadd.f32 %v1574, %v1715
        %v1793 = vadd.f32 %v1575, %v1720
        %v1794 = vadd.f32 %v1576, %v1723
        %v1795 = vadd.f32 %v1577, %v1728
        %v1796 = vadd.f32 %v1578, %v1731
        %v1797 = vadd.f32 %v1579, %v1736
        %v1798 = vadd.f32 %v1580, %v1739
        %v1799 = vadd.f32 %v1581, %v1744
        %v1800 = vadd.f32 %v1582, %v1747
        %v1801 = vadd.f32 %v1583, %v1752
        %v1802 = vadd.f32 %v1584, %v1755
        %v1803 = vadd.f32 %v1585, %v1760
        %v1804 = vadd.f32 %v1586, %v1763
        %v1805 = vadd.f32 %v1587, %v1768
        %v1806 = vadd.f32 %v1588, %v1771
        %v1807 = vadd.f32 %v1589, %v1776
        %v1808 = vadd.f32 %v1590, %v1779
        %v1809 = vadd.f32 %v1591, %v1784
        %v1810 = vld [vmem:[%s206 + $0xc] sm:$0xc]
        %v1811 = vld [vmem:[%s206 + $0x10] sm:$0xf]
        %v1812 = vld [vmem:[%s206 + $0x14] sm:$0xf]
        %v1813 = vld [vmem:[%s206 + $0x18] sm:$0xf]
        %v1814 = vld [vmem:[%s206 + $0x1c] sm:$0xf]
        %v1815 = vld [vmem:[%s206 + $0x20] sm:$0xf]
        %v1816 = vld [vmem:[%s206 + $0x24] sm:$0xf]
        %v1817 = vld [vmem:[%s206 + $0x28] sm:$0xf]
        %v1818 = vld [vmem:[%s206 + $0x2c] sm:$0xf]
        %v1819 = vld [vmem:[%s206 + $0x30] sm:$0xf]
        %v1820 = vld [vmem:[%s206 + $0x34] sm:$0xf]
        %v1821 = vld [vmem:[%s206 + $0x38] sm:$0xf]
        %v1822 = vld [vmem:[%s206 + $0x3c] sm:$0xf]
        %v1823 = vld [vmem:[%s206 + $0x40] sm:$0xf]
        %v1824 = vld [vmem:[%s206 + $0x44] sm:$0xf]
        %v1825 = vld [vmem:[%s206 + $0x48] sm:$0xf]
        %v1826 = vld [vmem:[%s206 + $0x4c] sm:$0xf]
        %v1827 = vld [vmem:[%s206 + $0x50] sm:$0xf]
        %v1828 = vld [vmem:[%s206 + $0x54] sm:$0xf]
        %v1829 = vld [vmem:[%s206 + $0x58] sm:$0xf]
        %v1830 = vld [vmem:[%s206 + $0x5c] sm:$0xf]
        %v1831 = vld [vmem:[%s206 + $0x60] sm:$0x3]
        %s1832 = scalar_lea.vmem %s210, 192
        %v1833 = vld [vmem:[%s1832] sm:$0xf]
        %v1834 = vld [vmem:[%s1832 + $0x4] sm:$0xf]
        %v1835 = vld [vmem:[%s1832 + $0x8] sm:$0xf]
        %v1836 = vld [vmem:[%s1832 + $0xc] sm:$0xf]
        %v1837 = vld [vmem:[%s1832 + $0x10] sm:$0xf]
        %v1838 = vld [vmem:[%s1832 + $0x14] sm:$0xf]
        %v1839 = vld [vmem:[%s1832 + $0x18] sm:$0xf]
        %v1840 = vld [vmem:[%s1832 + $0x1c] sm:$0xf]
        %v1863 = vunpack.c.l.b16 %v1810
        %v1864 = vunpack.c.l.b16 %v1811
        %v1865 = vunpack.c.l.b16 %v1812
        %v1866 = vunpack.c.l.b16 %v1813
        %v1867 = vunpack.c.l.b16 %v1814
        %v1868 = vunpack.c.l.b16 %v1815
        %v1869 = vunpack.c.l.b16 %v1816
        %v1870 = vunpack.c.l.b16 %v1817
        %v1871 = vunpack.c.l.b16 %v1818
        %v1872 = vunpack.c.l.b16 %v1819
        %v1873 = vunpack.c.l.b16 %v1820
        %v1874 = vunpack.c.l.b16 %v1821
        %v1875 = vunpack.c.l.b16 %v1822
        %v1876 = vunpack.c.l.b16 %v1823
        %v1877 = vunpack.c.l.b16 %v1824
        %v1878 = vunpack.c.l.b16 %v1825
        %v1879 = vunpack.c.l.b16 %v1826
        %v1880 = vunpack.c.l.b16 %v1827
        %v1881 = vunpack.c.l.b16 %v1828
        %v1882 = vunpack.c.l.b16 %v1829
        %v1883 = vunpack.c.l.b16 %v1830
        %v1884 = vunpack.c.l.b16 %v1831
        %v1885 = vpack.c.b16 %v1864, %v1863
        %v1886 = vpack.c.b16 %v1866, %v1865
        %v1887 = vpack.c.b16 %v1868, %v1867
        %v1888 = vpack.c.b16 %v1870, %v1869
        %v1889 = vpack.c.b16 %v1872, %v1871
        %v1890 = vpack.c.b16 %v1874, %v1873
        %v1891 = vpack.c.b16 %v1876, %v1875
        %v1892 = vpack.c.b16 %v1878, %v1877
        %v1893 = vpack.c.b16 %v1880, %v1879
        %v1894 = vpack.c.b16 %v1882, %v1881
        %v1895 = vpack.c.b16 %v1884, %v1883
        %vm1896 = vcmask 1045504
        %v1897 = vrot.slane %v1885, 2
        %v1898 = vrot.slane %v1886, 2
        %v1899 = vsel %vm1896, %v1897, %v1898
        %v1900 = vrot.slane %v1887, 2
        %v1901 = vsel %vm1896, %v1898, %v1900
        %v1902 = vrot.slane %v1888, 2
        %v1903 = vsel %vm1896, %v1900, %v1902
        %v1904 = vrot.slane %v1889, 2
        %v1905 = vsel %vm1896, %v1902, %v1904
        %v1906 = vrot.slane %v1890, 2
        %v1907 = vsel %vm1896, %v1904, %v1906
        %v1908 = vrot.slane %v1891, 2
        %v1909 = vsel %vm1896, %v1906, %v1908
        %v1910 = vrot.slane %v1892, 2
        %v1911 = vsel %vm1896, %v1908, %v1910
        %v1912 = vrot.slane %v1893, 2
        %v1913 = vsel %vm1896, %v1910, %v1912
        %v1914 = vrot.slane %v1894, 2
        %v1915 = vsel %vm1896, %v1912, %v1914
        %v1916 = vrot.slane %v1895, 2
        %v1917 = vsel %vm1896, %v1914, %v1916
        %v1926 = vunpack.c.l.b16 %v1833
        %v1927 = vunpack.c.l.b16 %v1834
        %v1928 = vunpack.c.l.b16 %v1835
        %v1929 = vunpack.c.l.b16 %v1836
        %v1930 = vunpack.c.l.b16 %v1837
        %v1931 = vunpack.c.l.b16 %v1838
        %v1932 = vunpack.c.l.b16 %v1839
        %v1933 = vunpack.c.l.b16 %v1840
        %v1934 = vpack.c.b16 %v1927, %v1926
        %v1935 = vpack.c.b16 %v1929, %v1928
        %v1936 = vpack.c.b16 %v1931, %v1930
        %v1937 = vpack.c.b16 %v1933, %v1932
        %v1943 = vsel %vm421, %v1899, 0
        %v1946 = vsel %vm421, %v1901, 0
        %v1949 = vsel %vm421, %v1903, 0
        %v1952 = vsel %vm421, %v1905, 0
        %v1955 = vsel %vm421, %v1907, 0
        %v1958 = vsel %vm421, %v1909, 0
        %v1961 = vsel %vm421, %v1911, 0
        %v1964 = vsel %vm421, %v1913, 0
        %v1967 = vsel %vm421, %v1915, 0
        %v1970 = vsel %vm421, %v1917, 0
        %v1973 = vsel %vm421, %v1916, 0
        %1975 = vmatprep.subr.bf16.mxu0 0
        %1976 = vmatpush1.bf16.msra.mxu0 %v1934
        %1977 = vmatprep.subr.bf16.mxu0 0
        %1978 = vmatpush1.bf16.msra.mxu0 %v1935
        %1979 = vmatprep.subr.bf16.mxu0 0
        %1980 = vmatpush1.bf16.msra.mxu0 %v1936
        %1981 = vmatprep.subr.bf16.mxu0 0
        %1982 = vmatpush1.bf16.msra.mxu0 %v1937
        %1983 = vmatprep.subr.bf16.mxu0 0
        %1984 = vmatpush1.bf16.msra.mxu0 0
        %1985 = vmatprep.subr.bf16.mxu0 0
        %1986 = vmatpush1.bf16.msra.mxu0 0
        %1987 = vmatprep.subr.bf16.mxu0 0
        %1988 = vmatpush1.bf16.msra.mxu0 0
        %1989 = vmatprep.subr.bf16.mxu0 0
        %1990 = vmatpush1.bf16.msra.mxu0 0
        %1991 = vmatprep.subr.bf16.mxu0 0
        %1992 = vmatpush1.bf16.msra.mxu0 0
        %1993 = vmatprep.subr.bf16.mxu0 0
        %1994 = vmatpush1.bf16.msra.mxu0 0
        %1995 = vmatprep.subr.bf16.mxu0 0
        %1996 = vmatpush1.bf16.msra.mxu0 0
        %1997 = vmatprep.subr.bf16.mxu0 0
        %1998 = vmatpush1.bf16.msra.mxu0 0
        %1999 = vmatprep.subr.bf16.mxu0 0
        %2000 = vmatpush1.bf16.msra.mxu0 0
        %2001 = vmatprep.subr.bf16.mxu0 0
        %2002 = vmatpush1.bf16.msra.mxu0 0
        %2003 = vmatprep.subr.bf16.mxu0 0
        %2004 = vmatpush1.bf16.msra.mxu0 0
        %2005 = vmatprep.subr.bf16.mxu0 0
        %2006 = vmatpush1.bf16.msra.mxu0 0
        %2007 = vmatprep.mubr.bf16.mxu0 0
        %2008 = vmatmul.mubr.bf16.gmra.mrb[0].mxu0 %v1943
        %v2009 = vpop.f32.mrb[0].mxu0
        %v2010 = vadd.f32 0.0, %v2009
        %v2011 = vpop.f32.mrb[0].mxu0
        %v2012 = vpop.f32.mrb[0].mxu0
        %v2013 = vadd.f32 0.0, %v2012
        %v2014 = vpop.f32.mrb[0].mxu0
        %2015 = vmatprep.mubr.bf16.mxu0 0
        %2016 = vmatmul.mubr.bf16.gmra.mrb[0].mxu0 %v1946
        %v2017 = vpop.f32.mrb[0].mxu0
        %v2018 = vadd.f32 0.0, %v2017
        %v2019 = vpop.f32.mrb[0].mxu0
        %v2020 = vpop.f32.mrb[0].mxu0
        %v2021 = vadd.f32 0.0, %v2020
        %v2022 = vpop.f32.mrb[0].mxu0
        %2023 = vmatprep.mubr.bf16.mxu0 0
        %2024 = vmatmul.mubr.bf16.gmra.mrb[0].mxu0 %v1949
        %v2025 = vpop.f32.mrb[0].mxu0
        %v2026 = vadd.f32 0.0, %v2025
        %v2027 = vpop.f32.mrb[0].mxu0
        %v2028 = vpop.f32.mrb[0].mxu0
        %v2029 = vadd.f32 0.0, %v2028
        %v2030 = vpop.f32.mrb[0].mxu0
        %2031 = vmatprep.mubr.bf16.mxu0 0
        %2032 = vmatmul.mubr.bf16.gmra.mrb[0].mxu0 %v1952
        %v2033 = vpop.f32.mrb[0].mxu0
        %v2034 = vadd.f32 0.0, %v2033
        %v2035 = vpop.f32.mrb[0].mxu0
        %v2036 = vpop.f32.mrb[0].mxu0
        %v2037 = vadd.f32 0.0, %v2036
        %v2038 = vpop.f32.mrb[0].mxu0
        %2039 = vmatprep.mubr.bf16.mxu0 0
        %2040 = vmatmul.mubr.bf16.gmra.mrb[0].mxu0 %v1955
        %v2041 = vpop.f32.mrb[0].mxu0
        %v2042 = vadd.f32 0.0, %v2041
        %v2043 = vpop.f32.mrb[0].mxu0
        %v2044 = vpop.f32.mrb[0].mxu0
        %v2045 = vadd.f32 0.0, %v2044
        %v2046 = vpop.f32.mrb[0].mxu0
        %2047 = vmatprep.mubr.bf16.mxu0 0
        %2048 = vmatmul.mubr.bf16.gmra.mrb[0].mxu0 %v1958
        %v2049 = vpop.f32.mrb[0].mxu0
        %v2050 = vadd.f32 0.0, %v2049
        %v2051 = vpop.f32.mrb[0].mxu0
        %v2052 = vpop.f32.mrb[0].mxu0
        %v2053 = vadd.f32 0.0, %v2052
        %v2054 = vpop.f32.mrb[0].mxu0
        %2055 = vmatprep.mubr.bf16.mxu0 0
        %2056 = vmatmul.mubr.bf16.gmra.mrb[0].mxu0 %v1961
        %v2057 = vpop.f32.mrb[0].mxu0
        %v2058 = vadd.f32 0.0, %v2057
        %v2059 = vpop.f32.mrb[0].mxu0
        %v2060 = vpop.f32.mrb[0].mxu0
        %v2061 = vadd.f32 0.0, %v2060
        %v2062 = vpop.f32.mrb[0].mxu0
        %2063 = vmatprep.mubr.bf16.mxu0 0
        %2064 = vmatmul.mubr.bf16.gmra.mrb[0].mxu0 %v1964
        %v2065 = vpop.f32.mrb[0].mxu0
        %v2066 = vadd.f32 0.0, %v2065
        %v2067 = vpop.f32.mrb[0].mxu0
        %v2068 = vpop.f32.mrb[0].mxu0
        %v2069 = vadd.f32 0.0, %v2068
        %v2070 = vpop.f32.mrb[0].mxu0
        %2071 = vmatprep.mubr.bf16.mxu0 0
        %2072 = vmatmul.mubr.bf16.gmra.mrb[0].mxu0 %v1967
        %v2073 = vpop.f32.mrb[0].mxu0
        %v2074 = vadd.f32 0.0, %v2073
        %v2075 = vpop.f32.mrb[0].mxu0
        %v2076 = vpop.f32.mrb[0].mxu0
        %v2077 = vadd.f32 0.0, %v2076
        %v2078 = vpop.f32.mrb[0].mxu0
        %2079 = vmatprep.mubr.bf16.mxu0 0
        %2080 = vmatmul.mubr.bf16.gmra.mrb[0].mxu0 %v1970
        %v2081 = vpop.f32.mrb[0].mxu0
        %v2082 = vadd.f32 0.0, %v2081
        %v2083 = vpop.f32.mrb[0].mxu0
        %v2084 = vpop.f32.mrb[0].mxu0
        %v2085 = vadd.f32 0.0, %v2084
        %v2086 = vpop.f32.mrb[0].mxu0
        %2087 = vmatprep.mubr.bf16.mxu0 0
        %2088 = vmatmul.mubr.bf16.gmra.mrb[0].mxu0 %v1973
        %v2089 = vpop.f32.mrb[0].mxu0
        %v2090 = vadd.f32 0.0, %v2089
        %v2091 = vpop.f32.mrb[0].mxu0
        %v2092 = vpop.f32.mrb[0].mxu0
        %v2093 = vpop.f32.mrb[0].mxu0
        %2094 = vdwg.mxu0
        %v2095 = vadd.f32 %v1789, %v2010
        %v2096 = vadd.f32 %v1790, %v2013
        %v2097 = vadd.f32 %v1791, %v2018
        %v2098 = vadd.f32 %v1792, %v2021
        %v2099 = vadd.f32 %v1793, %v2026
        %v2100 = vadd.f32 %v1794, %v2029
        %v2101 = vadd.f32 %v1795, %v2034
        %v2102 = vadd.f32 %v1796, %v2037
        %v2103 = vadd.f32 %v1797, %v2042
        %v2104 = vadd.f32 %v1798, %v2045
        %v2105 = vadd.f32 %v1799, %v2050
        %v2106 = vadd.f32 %v1800, %v2053
        %v2107 = vadd.f32 %v1801, %v2058
        %v2108 = vadd.f32 %v1802, %v2061
        %v2109 = vadd.f32 %v1803, %v2066
        %v2110 = vadd.f32 %v1804, %v2069
        %v2111 = vadd.f32 %v1805, %v2074
        %v2112 = vadd.f32 %v1806, %v2077
        %v2113 = vadd.f32 %v1807, %v2082
        %v2114 = vadd.f32 %v1808, %v2085
        %v2115 = vadd.f32 %v1809, %v2090
        %v2116 = vld [vmem:[%s206 + $0x60] sm:$0x7]
        %s2117 = scalar_lea.vmem %s210, 224
        %v2118 = vld [vmem:[%s2117] sm:$0xf]
        %v2119 = vld [vmem:[%s2117 + $0x4] sm:$0xf]
        %v2120 = vld [vmem:[%s2117 + $0x8] sm:$0xf]
        %v2121 = vld [vmem:[%s2117 + $0xc] sm:$0xf]
        %v2122 = vld [vmem:[%s2117 + $0x10] sm:$0xf]
        %v2123 = vld [vmem:[%s2117 + $0x14] sm:$0xf]
        %v2124 = vld [vmem:[%s2117 + $0x18] sm:$0xf]
        %v2125 = vld [vmem:[%s2117 + $0x1c] sm:$0xf]
        %v2127 = vunpack.c.l.b16 %v2116
        %v2128 = vpack.c.b16 %v2127, %v1883
        %vm2129 = vsmask.f32 5376
        %v2131 = vshrl.u32 %v1885, 16
        %v2133 = vrot.slane %v2131, 2
        %v2134 = vshll.u32 %v1885, 16
        %v2136 = vrot.slane %v2134, 3
        %v2137 = vor.u32 %v2133, %v2136
        %v2139 = vshrl.u32 %v1886, 16
        %v2141 = vrot.slane %v2139, 2
        %v2142 = vshll.u32 %v1886, 16
        %v2144 = vrot.slane %v2142, 3
        %v2145 = vor.u32 %v2141, %v2144
        %v2146 = vsel %vm2129, %v2137, %v2145
        %v2148 = vshrl.u32 %v1887, 16
        %v2150 = vrot.slane %v2148, 2
        %v2151 = vshll.u32 %v1887, 16
        %v2153 = vrot.slane %v2151, 3
        %v2154 = vor.u32 %v2150, %v2153
        %v2155 = vsel %vm2129, %v2145, %v2154
        %v2157 = vshrl.u32 %v1888, 16
        %v2159 = vrot.slane %v2157, 2
        %v2160 = vshll.u32 %v1888, 16
        %v2162 = vrot.slane %v2160, 3
        %v2163 = vor.u32 %v2159, %v2162
        %v2164 = vsel %vm2129, %v2154, %v2163
        %v2166 = vshrl.u32 %v1889, 16
        %v2168 = vrot.slane %v2166, 2
        %v2169 = vshll.u32 %v1889, 16
        %v2171 = vrot.slane %v2169, 3
        %v2172 = vor.u32 %v2168, %v2171
        %v2173 = vsel %vm2129, %v2163, %v2172
        %v2175 = vshrl.u32 %v1890, 16
        %v2177 = vrot.slane %v2175, 2
        %v2178 = vshll.u32 %v1890, 16
        %v2180 = vrot.slane %v2178, 3
        %v2181 = vor.u32 %v2177, %v2180
        %v2182 = vsel %vm2129, %v2172, %v2181
        %v2184 = vshrl.u32 %v1891, 16
        %v2186 = vrot.slane %v2184, 2
        %v2187 = vshll.u32 %v1891, 16
        %v2189 = vrot.slane %v2187, 3
        %v2190 = vor.u32 %v2186, %v2189
        %v2191 = vsel %vm2129, %v2181, %v2190
        %v2193 = vshrl.u32 %v1892, 16
        %v2195 = vrot.slane %v2193, 2
        %v2196 = vshll.u32 %v1892, 16
        %v2198 = vrot.slane %v2196, 3
        %v2199 = vor.u32 %v2195, %v2198
        %v2200 = vsel %vm2129, %v2190, %v2199
        %v2202 = vshrl.u32 %v1893, 16
        %v2204 = vrot.slane %v2202, 2
        %v2205 = vshll.u32 %v1893, 16
        %v2207 = vrot.slane %v2205, 3
        %v2208 = vor.u32 %v2204, %v2207
        %v2209 = vsel %vm2129, %v2199, %v2208
        %v2211 = vshrl.u32 %v1894, 16
        %v2213 = vrot.slane %v2211, 2
        %v2214 = vshll.u32 %v1894, 16
        %v2216 = vrot.slane %v2214, 3
        %v2217 = vor.u32 %v2213, %v2216
        %v2218 = vsel %vm2129, %v2208, %v2217
        %v2220 = vshrl.u32 %v2128, 16
        %v2222 = vrot.slane %v2220, 2
        %v2223 = vshll.u32 %v2128, 16
        %v2225 = vrot.slane %v2223, 3
        %v2226 = vor.u32 %v2222, %v2225
        %v2227 = vsel %vm2129, %v2217, %v2226
        %v2236 = vunpack.c.l.b16 %v2118
        %v2237 = vunpack.c.l.b16 %v2119
        %v2238 = vunpack.c.l.b16 %v2120
        %v2239 = vunpack.c.l.b16 %v2121
        %v2240 = vunpack.c.l.b16 %v2122
        %v2241 = vunpack.c.l.b16 %v2123
        %v2242 = vunpack.c.l.b16 %v2124
        %v2243 = vunpack.c.l.b16 %v2125
        %v2244 = vpack.c.b16 %v2237, %v2236
        %v2245 = vpack.c.b16 %v2239, %v2238
        %v2246 = vpack.c.b16 %v2241, %v2240
        %v2247 = vpack.c.b16 %v2243, %v2242
        %v2253 = vsel %vm421, %v2146, 0
        %v2256 = vsel %vm421, %v2155, 0
        %v2259 = vsel %vm421, %v2164, 0
        %v2262 = vsel %vm421, %v2173, 0
        %v2265 = vsel %vm421, %v2182, 0
        %v2268 = vsel %vm421, %v2191, 0
        %v2271 = vsel %vm421, %v2200, 0
        %v2274 = vsel %vm421, %v2209, 0
        %v2277 = vsel %vm421, %v2218, 0
        %v2280 = vsel %vm421, %v2227, 0
        %v2283 = vsel %vm421, %v2226, 0
        %2285 = vmatprep.subr.bf16.mxu0 0
        %2286 = vmatpush1.bf16.msra.mxu0 %v2244
        %2287 = vmatprep.subr.bf16.mxu0 0
        %2288 = vmatpush1.bf16.msra.mxu0 %v2245
        %2289 = vmatprep.subr.bf16.mxu0 0
        %2290 = vmatpush1.bf16.msra.mxu0 %v2246
        %2291 = vmatprep.subr.bf16.mxu0 0
        %2292 = vmatpush1.bf16.msra.mxu0 %v2247
        %2293 = vmatprep.subr.bf16.mxu0 0
        %2294 = vmatpush1.bf16.msra.mxu0 0
        %2295 = vmatprep.subr.bf16.mxu0 0
        %2296 = vmatpush1.bf16.msra.mxu0 0
        %2297 = vmatprep.subr.bf16.mxu0 0
        %2298 = vmatpush1.bf16.msra.mxu0 0
        %2299 = vmatprep.subr.bf16.mxu0 0
        %2300 = vmatpush1.bf16.msra.mxu0 0
        %2301 = vmatprep.subr.bf16.mxu0 0
        %2302 = vmatpush1.bf16.msra.mxu0 0
        %2303 = vmatprep.subr.bf16.mxu0 0
        %2304 = vmatpush1.bf16.msra.mxu0 0
        %2305 = vmatprep.subr.bf16.mxu0 0
        %2306 = vmatpush1.bf16.msra.mxu0 0
        %2307 = vmatprep.subr.bf16.mxu0 0
        %2308 = vmatpush1.bf16.msra.mxu0 0
        %2309 = vmatprep.subr.bf16.mxu0 0
        %2310 = vmatpush1.bf16.msra.mxu0 0
        %2311 = vmatprep.subr.bf16.mxu0 0
        %2312 = vmatpush1.bf16.msra.mxu0 0
        %2313 = vmatprep.subr.bf16.mxu0 0
        %2314 = vmatpush1.bf16.msra.mxu0 0
        %2315 = vmatprep.subr.bf16.mxu0 0
        %2316 = vmatpush1.bf16.msra.mxu0 0
        %2317 = vmatprep.mubr.bf16.mxu0 0
        %2318 = vmatmul.mubr.bf16.gmra.mrb[0].mxu0 %v2253
        %v2319 = vpop.f32.mrb[0].mxu0
        %v2320 = vadd.f32 0.0, %v2319
        %v2321 = vpop.f32.mrb[0].mxu0
        %v2322 = vpop.f32.mrb[0].mxu0
        %v2323 = vadd.f32 0.0, %v2322
        %v2324 = vpop.f32.mrb[0].mxu0
        %2325 = vmatprep.mubr.bf16.mxu0 0
        %2326 = vmatmul.mubr.bf16.gmra.mrb[0].mxu0 %v2256
        %v2327 = vpop.f32.mrb[0].mxu0
        %v2328 = vadd.f32 0.0, %v2327
        %v2329 = vpop.f32.mrb[0].mxu0
        %v2330 = vpop.f32.mrb[0].mxu0
        %v2331 = vadd.f32 0.0, %v2330
        %v2332 = vpop.f32.mrb[0].mxu0
        %2333 = vmatprep.mubr.bf16.mxu0 0
        %2334 = vmatmul.mubr.bf16.gmra.mrb[0].mxu0 %v2259
        %v2335 = vpop.f32.mrb[0].mxu0
        %v2336 = vadd.f32 0.0, %v2335
        %v2337 = vpop.f32.mrb[0].mxu0
        %v2338 = vpop.f32.mrb[0].mxu0
        %v2339 = vadd.f32 0.0, %v2338
        %v2340 = vpop.f32.mrb[0].mxu0
        %2341 = vmatprep.mubr.bf16.mxu0 0
        %2342 = vmatmul.mubr.bf16.gmra.mrb[0].mxu0 %v2262
        %v2343 = vpop.f32.mrb[0].mxu0
        %v2344 = vadd.f32 0.0, %v2343
        %v2345 = vpop.f32.mrb[0].mxu0
        %v2346 = vpop.f32.mrb[0].mxu0
        %v2347 = vadd.f32 0.0, %v2346
        %v2348 = vpop.f32.mrb[0].mxu0
        %2349 = vmatprep.mubr.bf16.mxu0 0
        %2350 = vmatmul.mubr.bf16.gmra.mrb[0].mxu0 %v2265
        %v2351 = vpop.f32.mrb[0].mxu0
        %v2352 = vadd.f32 0.0, %v2351
        %v2353 = vpop.f32.mrb[0].mxu0
        %v2354 = vpop.f32.mrb[0].mxu0
        %v2355 = vadd.f32 0.0, %v2354
        %v2356 = vpop.f32.mrb[0].mxu0
        %2357 = vmatprep.mubr.bf16.mxu0 0
        %2358 = vmatmul.mubr.bf16.gmra.mrb[0].mxu0 %v2268
        %v2359 = vpop.f32.mrb[0].mxu0
        %v2360 = vadd.f32 0.0, %v2359
        %v2361 = vpop.f32.mrb[0].mxu0
        %v2362 = vpop.f32.mrb[0].mxu0
        %v2363 = vadd.f32 0.0, %v2362
        %v2364 = vpop.f32.mrb[0].mxu0
        %2365 = vmatprep.mubr.bf16.mxu0 0
        %2366 = vmatmul.mubr.bf16.gmra.mrb[0].mxu0 %v2271
        %v2367 = vpop.f32.mrb[0].mxu0
        %v2368 = vadd.f32 0.0, %v2367
        %v2369 = vpop.f32.mrb[0].mxu0
        %v2370 = vpop.f32.mrb[0].mxu0
        %v2371 = vadd.f32 0.0, %v2370
        %v2372 = vpop.f32.mrb[0].mxu0
        %2373 = vmatprep.mubr.bf16.mxu0 0
        %2374 = vmatmul.mubr.bf16.gmra.mrb[0].mxu0 %v2274
        %v2375 = vpop.f32.mrb[0].mxu0
        %v2376 = vadd.f32 0.0, %v2375
        %v2377 = vpop.f32.mrb[0].mxu0
        %v2378 = vpop.f32.mrb[0].mxu0
        %v2379 = vadd.f32 0.0, %v2378
        %v2380 = vpop.f32.mrb[0].mxu0
        %2381 = vmatprep.mubr.bf16.mxu0 0
        %2382 = vmatmul.mubr.bf16.gmra.mrb[0].mxu0 %v2277
        %v2383 = vpop.f32.mrb[0].mxu0
        %v2384 = vadd.f32 0.0, %v2383
        %v2385 = vpop.f32.mrb[0].mxu0
        %v2386 = vpop.f32.mrb[0].mxu0
        %v2387 = vadd.f32 0.0, %v2386
        %v2388 = vpop.f32.mrb[0].mxu0
        %2389 = vmatprep.mubr.bf16.mxu0 0
        %2390 = vmatmul.mubr.bf16.gmra.mrb[0].mxu0 %v2280
        %v2391 = vpop.f32.mrb[0].mxu0
        %v2392 = vadd.f32 0.0, %v2391
        %v2393 = vpop.f32.mrb[0].mxu0
        %v2394 = vpop.f32.mrb[0].mxu0
        %v2395 = vadd.f32 0.0, %v2394
        %v2396 = vpop.f32.mrb[0].mxu0
        %2397 = vmatprep.mubr.bf16.mxu0 0
        %2398 = vmatmul.mubr.bf16.gmra.mrb[0].mxu0 %v2283
        %v2399 = vpop.f32.mrb[0].mxu0
        %v2400 = vadd.f32 0.0, %v2399
        %v2401 = vpop.f32.mrb[0].mxu0
        %v2402 = vpop.f32.mrb[0].mxu0
        %v2403 = vpop.f32.mrb[0].mxu0
        %2404 = vdwg.mxu0
        %v2405 = vadd.f32 %v2095, %v2320
        %v2406 = vadd.f32 %v2096, %v2323
        %v2407 = vadd.f32 %v2097, %v2328
        %v2408 = vadd.f32 %v2098, %v2331
        %v2409 = vadd.f32 %v2099, %v2336
        %v2410 = vadd.f32 %v2100, %v2339
        %v2411 = vadd.f32 %v2101, %v2344
        %v2412 = vadd.f32 %v2102, %v2347
        %v2413 = vadd.f32 %v2103, %v2352
        %v2414 = vadd.f32 %v2104, %v2355
        %v2415 = vadd.f32 %v2105, %v2360
        %v2416 = vadd.f32 %v2106, %v2363
        %v2417 = vadd.f32 %v2107, %v2368
        %v2418 = vadd.f32 %v2108, %v2371
        %v2419 = vadd.f32 %v2109, %v2376
        %v2420 = vadd.f32 %v2110, %v2379
        %v2421 = vadd.f32 %v2111, %v2384
        %v2422 = vadd.f32 %v2112, %v2387
        %v2423 = vadd.f32 %v2113, %v2392
        %v2424 = vadd.f32 %v2114, %v2395
        %v2425 = vadd.f32 %v2115, %v2400
        %v2426 = vld [vmem:[%s206 + $0xc] sm:$0x8]
        %s2427 = scalar_lea.vmem %s210, 256
        %v2428 = vld [vmem:[%s2427] sm:$0xf]
        %v2429 = vld [vmem:[%s2427 + $0x4] sm:$0xf]
        %v2430 = vld [vmem:[%s2427 + $0x8] sm:$0xf]
        %v2431 = vld [vmem:[%s2427 + $0xc] sm:$0xf]
        %v2432 = vld [vmem:[%s2427 + $0x10] sm:$0xf]
        %v2433 = vld [vmem:[%s2427 + $0x14] sm:$0xf]
        %v2434 = vld [vmem:[%s2427 + $0x18] sm:$0xf]
        %v2435 = vld [vmem:[%s2427 + $0x1c] sm:$0xf]
        %v2437 = vunpack.c.l.b16 %v2426
        %v2438 = vpack.c.b16 %v1864, %v2437
        %v2439 = vrot.slane %v2438, 3
        %v2440 = vrot.slane %v1886, 3
        %v2441 = vsel %vm1062, %v2439, %v2440
        %v2442 = vrot.slane %v1887, 3
        %v2443 = vsel %vm1062, %v2440, %v2442
        %v2444 = vrot.slane %v1888, 3
        %v2445 = vsel %vm1062, %v2442, %v2444
        %v2446 = vrot.slane %v1889, 3
        %v2447 = vsel %vm1062, %v2444, %v2446
        %v2448 = vrot.slane %v1890, 3
        %v2449 = vsel %vm1062, %v2446, %v2448
        %v2450 = vrot.slane %v1891, 3
        %v2451 = vsel %vm1062, %v2448, %v2450
        %v2452 = vrot.slane %v1892, 3
        %v2453 = vsel %vm1062, %v2450, %v2452
        %v2454 = vrot.slane %v1893, 3
        %v2455 = vsel %vm1062, %v2452, %v2454
        %v2456 = vrot.slane %v1894, 3
        %v2457 = vsel %vm1062, %v2454, %v2456
        %v2458 = vrot.slane %v2128, 3
        %v2459 = vsel %vm1062, %v2456, %v2458
        %v2468 = vunpack.c.l.b16 %v2428
        %v2469 = vunpack.c.l.b16 %v2429
        %v2470 = vunpack.c.l.b16 %v2430
        %v2471 = vunpack.c.l.b16 %v2431
        %v2472 = vunpack.c.l.b16 %v2432
        %v2473 = vunpack.c.l.b16 %v2433
        %v2474 = vunpack.c.l.b16 %v2434
        %v2475 = vunpack.c.l.b16 %v2435
        %v2476 = vpack.c.b16 %v2469, %v2468
        %v2477 = vpack.c.b16 %v2471, %v2470
        %v2478 = vpack.c.b16 %v2473, %v2472
        %v2479 = vpack.c.b16 %v2475, %v2474
        %v2485 = vsel %vm421, %v2441, 0
        %v2488 = vsel %vm421, %v2443, 0
        %v2491 = vsel %vm421, %v2445, 0
        %v2494 = vsel %vm421, %v2447, 0
        %v2497 = vsel %vm421, %v2449, 0
        %v2500 = vsel %vm421, %v2451, 0
        %v2503 = vsel %vm421, %v2453, 0
        %v2506 = vsel %vm421, %v2455, 0
        %v2509 = vsel %vm421, %v2457, 0
        %v2512 = vsel %vm421, %v2459, 0
        %v2515 = vsel %vm421, %v2458, 0
        %2517 = vmatprep.subr.bf16.mxu0 0
        %2518 = vmatpush1.bf16.msra.mxu0 %v2476
        %2519 = vmatprep.subr.bf16.mxu0 0
        %2520 = vmatpush1.bf16.msra.mxu0 %v2477
        %2521 = vmatprep.subr.bf16.mxu0 0
        %2522 = vmatpush1.bf16.msra.mxu0 %v2478
        %2523 = vmatprep.subr.bf16.mxu0 0
        %2524 = vmatpush1.bf16.msra.mxu0 %v2479
        %2525 = vmatprep.subr.bf16.mxu0 0
        %2526 = vmatpush1.bf16.msra.mxu0 0
        %2527 = vmatprep.subr.bf16.mxu0 0
        %2528 = vmatpush1.bf16.msra.mxu0 0
        %2529 = vmatprep.subr.bf16.mxu0 0
        %2530 = vmatpush1.bf16.msra.mxu0 0
        %2531 = vmatprep.subr.bf16.mxu0 0
        %2532 = vmatpush1.bf16.msra.mxu0 0
        %2533 = vmatprep.subr.bf16.mxu0 0
        %2534 = vmatpush1.bf16.msra.mxu0 0
        %2535 = vmatprep.subr.bf16.mxu0 0
        %2536 = vmatpush1.bf16.msra.mxu0 0
        %2537 = vmatprep.subr.bf16.mxu0 0
        %2538 = vmatpush1.bf16.msra.mxu0 0
        %2539 = vmatprep.subr.bf16.mxu0 0
        %2540 = vmatpush1.bf16.msra.mxu0 0
        %2541 = vmatprep.subr.bf16.mxu0 0
        %2542 = vmatpush1.bf16.msra.mxu0 0
        %2543 = vmatprep.subr.bf16.mxu0 0
        %2544 = vmatpush1.bf16.msra.mxu0 0
        %2545 = vmatprep.subr.bf16.mxu0 0
        %2546 = vmatpush1.bf16.msra.mxu0 0
        %2547 = vmatprep.subr.bf16.mxu0 0
        %2548 = vmatpush1.bf16.msra.mxu0 0
        %2549 = vmatprep.mubr.bf16.mxu0 0
        %2550 = vmatmul.mubr.bf16.gmra.mrb[0].mxu0 %v2485
        %v2551 = vpop.f32.mrb[0].mxu0
        %v2552 = vadd.f32 0.0, %v2551
        %v2553 = vpop.f32.mrb[0].mxu0
        %v2554 = vpop.f32.mrb[0].mxu0
        %v2555 = vadd.f32 0.0, %v2554
        %v2556 = vpop.f32.mrb[0].mxu0
        %2557 = vmatprep.mubr.bf16.mxu0 0
        %2558 = vmatmul.mubr.bf16.gmra.mrb[0].mxu0 %v2488
        %v2559 = vpop.f32.mrb[0].mxu0
        %v2560 = vadd.f32 0.0, %v2559
        %v2561 = vpop.f32.mrb[0].mxu0
        %v2562 = vpop.f32.mrb[0].mxu0
        %v2563 = vadd.f32 0.0, %v2562
        %v2564 = vpop.f32.mrb[0].mxu0
        %2565 = vmatprep.mubr.bf16.mxu0 0
        %2566 = vmatmul.mubr.bf16.gmra.mrb[0].mxu0 %v2491
        %v2567 = vpop.f32.mrb[0].mxu0
        %v2568 = vadd.f32 0.0, %v2567
        %v2569 = vpop.f32.mrb[0].mxu0
        %v2570 = vpop.f32.mrb[0].mxu0
        %v2571 = vadd.f32 0.0, %v2570
        %v2572 = vpop.f32.mrb[0].mxu0
        %2573 = vmatprep.mubr.bf16.mxu0 0
        %2574 = vmatmul.mubr.bf16.gmra.mrb[0].mxu0 %v2494
        %v2575 = vpop.f32.mrb[0].mxu0
        %v2576 = vadd.f32 0.0, %v2575
        %v2577 = vpop.f32.mrb[0].mxu0
        %v2578 = vpop.f32.mrb[0].mxu0
        %v2579 = vadd.f32 0.0, %v2578
        %v2580 = vpop.f32.mrb[0].mxu0
        %2581 = vmatprep.mubr.bf16.mxu0 0
        %2582 = vmatmul.mubr.bf16.gmra.mrb[0].mxu0 %v2497
        %v2583 = vpop.f32.mrb[0].mxu0
        %v2584 = vadd.f32 0.0, %v2583
        %v2585 = vpop.f32.mrb[0].mxu0
        %v2586 = vpop.f32.mrb[0].mxu0
        %v2587 = vadd.f32 0.0, %v2586
        %v2588 = vpop.f32.mrb[0].mxu0
        %2589 = vmatprep.mubr.bf16.mxu0 0
        %2590 = vmatmul.mubr.bf16.gmra.mrb[0].mxu0 %v2500
        %v2591 = vpop.f32.mrb[0].mxu0
        %v2592 = vadd.f32 0.0, %v2591
        %v2593 = vpop.f32.mrb[0].mxu0
        %v2594 = vpop.f32.mrb[0].mxu0
        %v2595 = vadd.f32 0.0, %v2594
        %v2596 = vpop.f32.mrb[0].mxu0
        %2597 = vmatprep.mubr.bf16.mxu0 0
        %2598 = vmatmul.mubr.bf16.gmra.mrb[0].mxu0 %v2503
        %v2599 = vpop.f32.mrb[0].mxu0
        %v2600 = vadd.f32 0.0, %v2599
        %v2601 = vpop.f32.mrb[0].mxu0
        %v2602 = vpop.f32.mrb[0].mxu0
        %v2603 = vadd.f32 0.0, %v2602
        %v2604 = vpop.f32.mrb[0].mxu0
        %2605 = vmatprep.mubr.bf16.mxu0 0
        %2606 = vmatmul.mubr.bf16.gmra.mrb[0].mxu0 %v2506
        %v2607 = vpop.f32.mrb[0].mxu0
        %v2608 = vadd.f32 0.0, %v2607
        %v2609 = vpop.f32.mrb[0].mxu0
        %v2610 = vpop.f32.mrb[0].mxu0
        %v2611 = vadd.f32 0.0, %v2610
        %v2612 = vpop.f32.mrb[0].mxu0
        %2613 = vmatprep.mubr.bf16.mxu0 0
        %2614 = vmatmul.mubr.bf16.gmra.mrb[0].mxu0 %v2509
        %v2615 = vpop.f32.mrb[0].mxu0
        %v2616 = vadd.f32 0.0, %v2615
        %v2617 = vpop.f32.mrb[0].mxu0
        %v2618 = vpop.f32.mrb[0].mxu0
        %v2619 = vadd.f32 0.0, %v2618
        %v2620 = vpop.f32.mrb[0].mxu0
        %2621 = vmatprep.mubr.bf16.mxu0 0
        %2622 = vmatmul.mubr.bf16.gmra.mrb[0].mxu0 %v2512
        %v2623 = vpop.f32.mrb[0].mxu0
        %v2624 = vadd.f32 0.0, %v2623
        %v2625 = vpop.f32.mrb[0].mxu0
        %v2626 = vpop.f32.mrb[0].mxu0
        %v2627 = vadd.f32 0.0, %v2626
        %v2628 = vpop.f32.mrb[0].mxu0
        %2629 = vmatprep.mubr.bf16.mxu0 0
        %2630 = vmatmul.mubr.bf16.gmra.mrb[0].mxu0 %v2515
        %v2631 = vpop.f32.mrb[0].mxu0
        %v2632 = vadd.f32 0.0, %v2631
        %v2633 = vpop.f32.mrb[0].mxu0
        %v2634 = vpop.f32.mrb[0].mxu0
        %v2635 = vpop.f32.mrb[0].mxu0
        %2636 = vdwg.mxu0
        %v2637 = vadd.f32 %v2405, %v2552
        %v2638 = vadd.f32 %v2406, %v2555
        %v2639 = vadd.f32 %v2407, %v2560
        %v2640 = vadd.f32 %v2408, %v2563
        %v2641 = vadd.f32 %v2409, %v2568
        %v2642 = vadd.f32 %v2410, %v2571
        %v2643 = vadd.f32 %v2411, %v2576
        %v2644 = vadd.f32 %v2412, %v2579
        %v2645 = vadd.f32 %v2413, %v2584
        %v2646 = vadd.f32 %v2414, %v2587
        %v2647 = vadd.f32 %v2415, %v2592
        %v2648 = vadd.f32 %v2416, %v2595
        %v2649 = vadd.f32 %v2417, %v2600
        %v2650 = vadd.f32 %v2418, %v2603
        %v2651 = vadd.f32 %v2419, %v2608
        %v2652 = vadd.f32 %v2420, %v2611
        %v2653 = vadd.f32 %v2421, %v2616
        %v2654 = vadd.f32 %v2422, %v2619
        %v2655 = vadd.f32 %v2423, %v2624
        %v2656 = vadd.f32 %v2424, %v2627
        %v2657 = vadd.f32 %v2425, %v2632
        %v2658 = vld [vmem:[%s213] sm:$0x1]
        %v2660 = vlaneseq
        %v2661 = vshrl.u32 %v2660, 7
        %v2662 = vsub.s32 0, %v2661
        %v2663 = vrot.slane %v2658, %v2662
        %v2665 = vadd.f32 %v2637, %v2663
        %v2666 = vadd.f32 %v2638, %v2663
        %v2667 = vadd.f32 %v2639, %v2663
        %v2668 = vadd.f32 %v2640, %v2663
        %v2669 = vadd.f32 %v2641, %v2663
        %v2670 = vadd.f32 %v2642, %v2663
        %v2671 = vadd.f32 %v2643, %v2663
        %v2672 = vadd.f32 %v2644, %v2663
        %v2673 = vadd.f32 %v2645, %v2663
        %v2674 = vadd.f32 %v2646, %v2663
        %v2675 = vadd.f32 %v2647, %v2663
        %v2676 = vadd.f32 %v2648, %v2663
        %v2677 = vadd.f32 %v2649, %v2663
        %v2678 = vadd.f32 %v2650, %v2663
        %v2679 = vadd.f32 %v2651, %v2663
        %v2680 = vadd.f32 %v2652, %v2663
        %v2681 = vadd.f32 %v2653, %v2663
        %v2682 = vadd.f32 %v2654, %v2663
        %v2683 = vadd.f32 %v2655, %v2663
        %v2684 = vadd.f32 %v2656, %v2663
        %v2685 = vadd.f32 %v2657, %v2663
        %v2686 = vmax.f32 %v2665, 0.0
        %v2687 = vmax.f32 %v2666, 0.0
        %v2688 = vmax.f32 %v2667, 0.0
        %v2689 = vmax.f32 %v2668, 0.0
        %v2690 = vmax.f32 %v2669, 0.0
        %v2691 = vmax.f32 %v2670, 0.0
        %v2692 = vmax.f32 %v2671, 0.0
        %v2693 = vmax.f32 %v2672, 0.0
        %v2694 = vmax.f32 %v2673, 0.0
        %v2695 = vmax.f32 %v2674, 0.0
        %v2696 = vmax.f32 %v2675, 0.0
        %v2697 = vmax.f32 %v2676, 0.0
        %v2698 = vmax.f32 %v2677, 0.0
        %v2699 = vmax.f32 %v2678, 0.0
        %v2700 = vmax.f32 %v2679, 0.0
        %v2701 = vmax.f32 %v2680, 0.0
        %v2702 = vmax.f32 %v2681, 0.0
        %v2703 = vmax.f32 %v2682, 0.0
        %v2704 = vmax.f32 %v2683, 0.0
        %v2705 = vmax.f32 %v2684, 0.0
        %v2706 = vmax.f32 %v2685, 0.0
        %v2707 = vpack.c.bf16 %v2687, %v2686
        %v2708 = vpack.c.bf16 %v2689, %v2688
        %v2709 = vpack.c.bf16 %v2691, %v2690
        %v2710 = vpack.c.bf16 %v2693, %v2692
        %v2711 = vpack.c.bf16 %v2695, %v2694
        %v2712 = vpack.c.bf16 %v2697, %v2696
        %v2713 = vpack.c.bf16 %v2699, %v2698
        %v2714 = vpack.c.bf16 %v2701, %v2700
        %v2715 = vpack.c.bf16 %v2703, %v2702
        %v2716 = vpack.c.bf16 %v2705, %v2704
        %v2717 = vpack.c.bf16 %v2706, %v2706
        %v2729 = vunpack.c.l.b16 %v2707
        %v2730 = vunpack.c.h.b16 %v2707
        %v2731 = vunpack.c.l.b16 %v2708
        %v2732 = vunpack.c.h.b16 %v2708
        %v2733 = vunpack.c.l.b16 %v2709
        %v2734 = vunpack.c.h.b16 %v2709
        %v2735 = vunpack.c.l.b16 %v2710
        %v2736 = vunpack.c.h.b16 %v2710
        %v2737 = vunpack.c.l.b16 %v2711
        %v2738 = vunpack.c.h.b16 %v2711
        %v2739 = vunpack.c.l.b16 %v2712
        %v2740 = vunpack.c.h.b16 %v2712
        %v2741 = vunpack.c.l.b16 %v2713
        %v2742 = vunpack.c.h.b16 %v2713
        %v2743 = vunpack.c.l.b16 %v2714
        %v2744 = vunpack.c.h.b16 %v2714
        %v2745 = vunpack.c.l.b16 %v2715
        %v2746 = vunpack.c.h.b16 %v2715
        %v2747 = vunpack.c.l.b16 %v2716
        %v2748 = vunpack.c.h.b16 %v2716
        %v2749 = vunpack.c.l.b16 %v2717
        %v2750 = vpack.c.b16 %v2729, %v2729
        %v2751 = vpack.c.b16 %v2730, %v2730
        %v2752 = vpack.c.b16 %v2731, %v2731
        %v2753 = vpack.c.b16 %v2732, %v2732
        %v2754 = vpack.c.b16 %v2733, %v2733
        %v2755 = vpack.c.b16 %v2734, %v2734
        %v2756 = vpack.c.b16 %v2735, %v2735
        %v2757 = vpack.c.b16 %v2736, %v2736
        %v2758 = vpack.c.b16 %v2737, %v2737
        %v2759 = vpack.c.b16 %v2738, %v2738
        %v2760 = vpack.c.b16 %v2739, %v2739
        %v2761 = vpack.c.b16 %v2740, %v2740
        %v2762 = vpack.c.b16 %v2741, %v2741
        %v2763 = vpack.c.b16 %v2742, %v2742
        %v2764 = vpack.c.b16 %v2743, %v2743
        %v2765 = vpack.c.b16 %v2744, %v2744
        %v2766 = vpack.c.b16 %v2745, %v2745
        %v2767 = vpack.c.b16 %v2746, %v2746
        %v2768 = vpack.c.b16 %v2747, %v2747
        %v2769 = vpack.c.b16 %v2748, %v2748
        %v2770 = vpack.c.b16 %v2749, %v2749
        %2792 = vst [vmem:[%s201] sm:$0xf] %v2750
        %2793 = vst [vmem:[%s201 + $0x4] sm:$0xf] %v2751
        %2794 = vst [vmem:[%s201 + $0x8] sm:$0xf] %v2752
        %2795 = vst [vmem:[%s201 + $0xc] sm:$0xf] %v2753
        %2796 = vst [vmem:[%s201 + $0x10] sm:$0xf] %v2754
        %2797 = vst [vmem:[%s201 + $0x14] sm:$0xf] %v2755
        %2798 = vst [vmem:[%s201 + $0x18] sm:$0xf] %v2756
        %2799 = vst [vmem:[%s201 + $0x1c] sm:$0xf] %v2757
        %2800 = vst [vmem:[%s201 + $0x20] sm:$0xf] %v2758
        %2801 = vst [vmem:[%s201 + $0x24] sm:$0xf] %v2759
        %2802 = vst [vmem:[%s201 + $0x28] sm:$0xf] %v2760
        %2803 = vst [vmem:[%s201 + $0x2c] sm:$0xf] %v2761
        %2804 = vst [vmem:[%s201 + $0x30] sm:$0xf] %v2762
        %2805 = vst [vmem:[%s201 + $0x34] sm:$0xf] %v2763
        %2806 = vst [vmem:[%s201 + $0x38] sm:$0xf] %v2764
        %2807 = vst [vmem:[%s201 + $0x3c] sm:$0xf] %v2765
        %2808 = vst [vmem:[%s201 + $0x40] sm:$0xf] %v2766
        %2809 = vst [vmem:[%s201 + $0x44] sm:$0xf] %v2767
        %2810 = vst [vmem:[%s201 + $0x48] sm:$0xf] %v2768
        %2811 = vst [vmem:[%s201 + $0x4c] sm:$0xf] %v2769
        %2812 = vst [vmem:[%s201 + $0x50] sm:$0xf] %v2770
        %s2813 = sand.u32 %s117, 1
        %s2814 = scalar_lea.sflag [#allocation3], %s2813
        %s2815 = sand.u32 %s117, 1
        %s2816 = smul.addr %s2815, 84
        %s2817 = scalar_lea.vmem [#allocation2], %s2816
        // Predicated region
        $region33: #{tpu_custom_call.1} parent=31 // pred_check
          %p2818 = pneg %p127
        $region34: #{tpu_custom_call.1} parent=31 // pred_check_branch
          %2820 = sbr.rel (%p2818) target = $region36
        $region35: #{tpu_custom_call.1} parent=31 // pred_region
          %s2822 = ssub.s32 1344, 1344
          %2823 = vsyncadd %s2814, %s2822
          %s2824 = smul.addr %s21, 21
          %s2825 = sadd.s32 %s22, %s2824
          %s2826 = smul.addr %s2825, 64
          %s2827 = scalar_lea.hbm %s3, %s2826
          %s2828 = sshll.u32 %s2817, 4
          %s2829 = int_to_ptr.vmem [resolvable:$true] %s2828
          %2834 = dma.vmem_to_hbm [thread:$0]  %s2829, 1344, %s2827, %s2814, 64, 64, 4
        $region36: #{tpu_custom_call.1} parent=31 // pred_fallthru
          _
      $region32: #{tpu_custom_call.1} parent=5 // pred_fallthru
        _
      %p2835 = scmp.le.s32.totalorder 2, %s12
      // Predicated region
      $region37: #{tpu_custom_call.1} parent=5 // pred_check
        %p2836 = pneg %p2835
      $region38: #{tpu_custom_call.1} parent=5 // pred_check_branch
        %2838 = sbr.rel (%p2836) target = $region40
      $region39: #{tpu_custom_call.1} parent=5 // pred_region
        %s2839 = ssub.s32 %s12, 2
        // Predicated region
        $region41: #{tpu_custom_call.1} parent=39 // pred_check
          %p2840 = pneg %p133
        $region42: #{tpu_custom_call.1} parent=39 // pred_check_branch
          %2842 = sbr.rel (%p2840) target = $region44
        $region43: #{tpu_custom_call.1} parent=39 // pred_region
          %s2843 = sand.u32 %s118, 1
          %s2844 = scalar_lea.sflag [#allocation3], %s2843
          %s2845 = sand.u32 %s118, 1
          %s2846 = smul.addr %s2845, 84
          %s2847 = scalar_lea.vmem [#allocation2], %s2846
          %2848 = dma.done %s2844, 1344
        $region44: #{tpu_custom_call.1} parent=39 // pred_fallthru
          _
      $region40: #{tpu_custom_call.1} parent=5 // pred_fallthru
        _
    $region6: #{tpu_custom_call.1} parent=1 // loop_footer
      %s16 = sadd.s32 1, %s12
    $region7: #{tpu_custom_call.1} parent=1 // loop_footer_branch
      %11 = sbr.rel target = $region3
    $region8: #{tpu_custom_call.1} parent=1 // loop_exit
      _
    %2849 = vsyncpa [#allocation3], 1
    %s2850 = scalar_lea.sflag [#allocation3], 1
    %2851 = vsyncpa %s2850, 1

</llo_original>
